<compile_context>
chip_gen: v5e
topology: v5e:2x2
jax: 0.10.0
libtpu: 0.0.40
codegen_flags: <defaults>
</compile_context>

<pallas_src>
import functools
import math

import jax
import jax.numpy as jnp
from jax.experimental import pallas as pl
from jax.experimental.pallas import tpu as pltpu

EPS = 1e-12  # LayerNorm variance_epsilon from the reference module


def _layernorm(x, gamma, beta):
    # PyTorch reference: (x - mean) / (std + eps), std is UNBIASED (N-1).
    d = x.shape[-1]
    mean = jnp.mean(x, axis=-1, keepdims=True)
    xc = x - mean
    var = jnp.sum(xc * xc, axis=-1, keepdims=True) * (1.0 / (d - 1))
    std = jnp.sqrt(var)
    inv = pl.reciprocal(std + EPS, approx=False)   # exact, for reference parity
    return gamma * (xc * inv) + beta


def encoder_kernel(n_heads, B, S,
                   x_ref,                       # (B, S, dna_dim)   f32  (invariant)
                   ftw_ref, ftb_ref,            # (dna, D) bf16, (1, D) f32 (invariant)
                   wqkv_ref, bqkv_ref,          # (1, D, 3D) bf16, (1, 1, 3D) f32
                   wo_ref, bo_ref,              # (1, D, D)  bf16, (1, 1, D)  f32
                   g1_ref, be1_ref,             # (1, 1, D) f32
                   w1_ref, b1_ref,              # (1, D, PF) bf16, (1, 1, PF) f32
                   w2_ref, b2_ref,              # (1, PF, D) bf16, (1, 1, D)  f32
                   g2_ref, be2_ref,             # (1, 1, D) f32
                   o_ref,                       # (B, S, D)  (resident across layers)
                   h_ref):                      # VMEM scratch (B*S, D) f32 — layer carry
    layer = pl.program_id(0)
    D = h_ref.shape[1]
    BS = B * S
    H = n_heads
    dh = D // H
    inv_scale = 1.0 / float(dh) ** 0.5

    # ---- ft: dna_dim -> hid_dim (only on the first grid step) --------------
    @pl.when(layer == 0)
    def _():
        x = x_ref[...].reshape(BS, x_ref.shape[-1]).astype(jnp.bfloat16)
        h_ref[...] = (jnp.dot(x, ftw_ref[...], preferred_element_type=jnp.float32)
                      + ftb_ref[...])

    h = h_ref[...]                               # (BS, D) f32, carried across layers

    # ---- Self-attention -----------------------------------------------------
    # Fused QKV projection: one (BS, D) x (D, 3D) bf16 matmul, f32 accumulation.
    qkv = (jnp.dot(h.astype(jnp.bfloat16), wqkv_ref[0],
                   preferred_element_type=jnp.float32) + bqkv_ref[0])      # (BS, 3D) f32
    q = (qkv[:, 0 * D:1 * D] * inv_scale).astype(jnp.bfloat16)            # scale Q, not energy
    k = qkv[:, 1 * D:2 * D].astype(jnp.bfloat16)
    v = qkv[:, 2 * D:3 * D].astype(jnp.bfloat16)

    def split_heads(m2d):                        # (S, D) -> (H, S, dh), heads-leading lane slices
        return jnp.stack([m2d[:, hh * dh:(hh + 1) * dh] for hh in range(H)], axis=0)

    ctx_rows = []
    for b in range(B):                           # static loop; attention batched over heads
        rows = slice(b * S, (b + 1) * S)
        qh, kh, vh = split_heads(q[rows]), split_heads(k[rows]), split_heads(v[rows])
        e = jnp.einsum('hqd,hkd->hqk', qh, kh,
                       preferred_element_type=jnp.float32)                 # (H, S, S) f32
        m = jnp.max(e, axis=-1, keepdims=True)
        p = jnp.exp(e - m)
        denom = jnp.sum(p, axis=-1, keepdims=True)
        attn = p * pl.reciprocal(denom, approx=True)                       # EUP
        c = jnp.einsum('hqk,hkd->hqd', attn.astype(jnp.bfloat16), vh,
                       preferred_element_type=jnp.float32)                 # (H, S, dh) f32
        ctx_rows.append(jnp.concatenate([c[hh] for hh in range(H)], axis=1))   # (S, D)
    ctx = jnp.concatenate(ctx_rows, axis=0)      # (BS, D) f32

    sa = (jnp.dot(ctx.astype(jnp.bfloat16), wo_ref[0],
                  preferred_element_type=jnp.float32) + bo_ref[0])

    # Residual + LayerNorm 1 (f32)
    y = _layernorm(h + sa, g1_ref[0], be1_ref[0])

    # ---- Position-wise feed-forward (Conv1d k=1 == per-position linear) ----
    hid = (jnp.dot(y.astype(jnp.bfloat16), w1_ref[0],
                   preferred_element_type=jnp.float32) + b1_ref[0])
    hid = jnp.maximum(hid, 0.0)                  # ReLU (f32)
    ff = (jnp.dot(hid.astype(jnp.bfloat16), w2_ref[0],
                  preferred_element_type=jnp.float32) + b2_ref[0])

    # Residual + LayerNorm 2 (f32) -> carry to next layer
    h_new = _layernorm(y + ff, g2_ref[0], be2_ref[0])
    h_ref[...] = h_new

    @pl.when(layer == pl.num_programs(0) - 1)
    def _():
        o_ref[...] = h_new.reshape(B, S, D).astype(o_ref.dtype)


def _derive_vmem_budget(B, S, dna_dim, D, PF):
    """Explicit per-call VMEM budget: per-layer weight blocks x 2 pipeline
    buffers + grid-invariant inputs + output + activation scratch + headroom,
    clamped below v7x's 64 MiB physical VMEM."""
    bfb, fb = 2, 4
    per_layer = ((D * 3 * D + D * D + D * PF + PF * D) * bfb        # bf16 matmul weights
                 + (3 * D + D + PF + D + 4 * D) * fb)               # f32 biases + LN params
    invariant = B * S * dna_dim * fb + dna_dim * D * bfb + D * fb   # x, ft_w, ft_b
    out_bytes = B * S * D * fb
    scratch = B * S * D * fb
    budget = 2 * per_layer + 2 * invariant + 2 * out_bytes + scratch + (4 << 20)
    return int(min(max(budget, 8 << 20), 48 << 20))


def encoder_forward(params, trg, n_heads):
    # trg: (B, S, dna_dim)
    B, S, dna_dim = trg.shape
    D = params["ft_w"].shape[1]
    L = params["wqkv"].shape[0]
    PF = params["w1"].shape[2]

    def invariant(shape):
        # Whole array as one block, same block for every layer step.
        return pl.BlockSpec(shape, lambda l: (0,) * len(shape))

    def per_layer(shape):
        # One layer's slice per grid step -> weight DMA pipelined behind compute.
        return pl.BlockSpec((1,) + shape, lambda l: (l,) + (0,) * len(shape))

    in_specs = [
        invariant((B, S, dna_dim)),                          # x (whole batch, one block)
        invariant((dna_dim, D)), invariant((1, D)),          # ft w, b
        per_layer((D, 3 * D)), per_layer((1, 3 * D)),        # fused qkv w, b
        per_layer((D, D)), per_layer((1, D)),                # attn out proj w, b
        per_layer((1, D)), per_layer((1, D)),                # ln1 gamma, beta
        per_layer((D, PF)), per_layer((1, PF)),              # fc1 w, b
        per_layer((PF, D)), per_layer((1, D)),               # fc2 w, b
        per_layer((1, D)), per_layer((1, D)),                # ln2 gamma, beta
    ]

    args = (
        trg,
        params["ft_w"], params["ft_b"],
        params["wqkv"], params["bqkv"], params["wo"], params["bo"],
        params["g1"], params["be1"],
        params["w1"], params["b1"], params["w2"], params["b2"],
        params["g2"], params["be2"],
    )

    return pl.pallas_call(
        functools.partial(encoder_kernel, n_heads, B, S),
        out_shape=jax.ShapeDtypeStruct((B, S, D), trg.dtype),
        grid=(L,),
        in_specs=in_specs,
        out_specs=pl.BlockSpec((B, S, D), lambda l: (0, 0, 0)),
        scratch_shapes=[pltpu.VMEM((B * S, D), jnp.float32)],   # cross-layer activation carry
        compiler_params=pltpu.CompilerParams(
            # Layer axis carries the activation -> must be "arbitrary".
            # (On v7x a leading "parallel" batch-block axis could be added to
            #  split work across the two TensorCores.)
            dimension_semantics=("arbitrary",),
            vmem_limit_bytes=_derive_vmem_budget(B, S, dna_dim, D, PF),
        ),
    )(*args)


# ----------------------------------------------------------------------------
# Parameter init (deterministic, synthetic) — weights stored (in, out),
# equivalent to PyTorch's y = x @ W.T + b with W of shape (out, in).
# Matmul weights stored in bf16 (MXU-native); biases / LayerNorm params in f32.
# ----------------------------------------------------------------------------
def init_encoder_params(key, dna_dim, hid_dim, n_layers, pf_dim):
    def dense(k, fan_in, fan_out):
        k1, k2 = jax.random.split(k)
        w = jax.random.normal(k1, (fan_in, fan_out), jnp.float32) * (1.0 / math.sqrt(fan_in))
        b = jax.random.normal(k2, (fan_out,), jnp.float32) * 0.02
        return w, b

    keys = jax.random.split(key, n_layers + 1)
    ft_w, ft_b = dense(keys[0], dna_dim, hid_dim)

    wqkv, bqkv, wo, bo = [], [], [], []
    w1, b1, w2, b2 = [], [], [], []
    g1, be1, g2, be2 = [], [], [], []
    ones_d = jnp.ones((1, hid_dim), jnp.float32)
    zeros_d = jnp.zeros((1, hid_dim), jnp.float32)
    for li in range(n_layers):
        lk = jax.random.split(keys[li + 1], 6)
        wq, bq_ = dense(lk[0], hid_dim, hid_dim)
        wk, bk_ = dense(lk[1], hid_dim, hid_dim)
        wv, bv_ = dense(lk[2], hid_dim, hid_dim)
        wo_l, bo_l = dense(lk[3], hid_dim, hid_dim)
        w1_l, b1_l = dense(lk[4], hid_dim, pf_dim)
        w2_l, b2_l = dense(lk[5], pf_dim, hid_dim)

        wqkv.append(jnp.concatenate([wq, wk, wv], axis=1).astype(jnp.bfloat16))  # (D, 3D)
        bqkv.append(jnp.concatenate([bq_, bk_, bv_])[None, :])                   # (1, 3D) f32
        wo.append(wo_l.astype(jnp.bfloat16)); bo.append(bo_l[None, :])
        w1.append(w1_l.astype(jnp.bfloat16)); b1.append(b1_l[None, :])
        w2.append(w2_l.astype(jnp.bfloat16)); b2.append(b2_l[None, :])
        g1.append(ones_d); be1.append(zeros_d)
        g2.append(ones_d); be2.append(zeros_d)

    stack = lambda xs: jnp.stack(xs, axis=0)
    return dict(
        ft_w=ft_w.astype(jnp.bfloat16), ft_b=ft_b[None, :],
        wqkv=stack(wqkv), bqkv=stack(bqkv), wo=stack(wo), bo=stack(bo),
        g1=stack(g1), be1=stack(be1),
        w1=stack(w1), b1=stack(b1), w2=stack(w2), b2=stack(b2),
        g2=stack(g2), be2=stack(be2),
    )


# ----------------------------------------------------------------------------
# Main
# ----------------------------------------------------------------------------
if __name__ == "__main__":
    dna_dim, hid_dim, n_layers, n_heads, pf_dim = 16, 32, 2, 4, 64
    B, S = 2, 8

    key = jax.random.PRNGKey(0)
    k_params, k_x = jax.random.split(key)
    params = init_encoder_params(k_params, dna_dim, hid_dim, n_layers, pf_dim)
    trg = jax.random.normal(k_x, (B, S, dna_dim), jnp.float32)

    out = encoder_forward(params, trg, n_heads)
    out = jax.block_until_ready(out)
    assert out.shape == (B, S, hid_dim)
    assert bool(jnp.all(jnp.isfinite(out)))
    print("KERNEL_OK")
</pallas_src>

<mosaic_0001>
module attributes {stable_mosaic.version = 11 : i64} {
  func.func @encoder_kernel(%arg0: i32, %arg1: memref<2x8x16xf32, #tpu.memory_space<vmem>>, %arg2: memref<16x32xbf16, #tpu.memory_space<vmem>>, %arg3: memref<1x32xf32, #tpu.memory_space<vmem>>, %arg4: memref<1x32x96xbf16, #tpu.memory_space<vmem>>, %arg5: memref<1x1x96xf32, #tpu.memory_space<vmem>>, %arg6: memref<1x32x32xbf16, #tpu.memory_space<vmem>>, %arg7: memref<1x1x32xf32, #tpu.memory_space<vmem>>, %arg8: memref<1x1x32xf32, #tpu.memory_space<vmem>>, %arg9: memref<1x1x32xf32, #tpu.memory_space<vmem>>, %arg10: memref<1x32x64xbf16, #tpu.memory_space<vmem>>, %arg11: memref<1x1x64xf32, #tpu.memory_space<vmem>>, %arg12: memref<1x64x32xbf16, #tpu.memory_space<vmem>>, %arg13: memref<1x1x32xf32, #tpu.memory_space<vmem>>, %arg14: memref<1x1x32xf32, #tpu.memory_space<vmem>>, %arg15: memref<1x1x32xf32, #tpu.memory_space<vmem>>, %arg16: memref<2x8x32xf32, #tpu.memory_space<vmem>>, %arg17: memref<16x32xf32, #tpu.memory_space<vmem>>) attributes {dimension_semantics = [#tpu.dimension_semantics<arbitrary>], iteration_bounds = array<i64: 2>, scalar_prefetch = 0 : i64, scratch_operands = 1 : i64, tpu.core_type = #tpu.core_type<tc>, window_params = [{pipeline_mode = #tpu.pipeline_mode<synchronous>, transform_indices = @transform_0, window_bounds = array<i64: 2, 8, 16>}, {pipeline_mode = #tpu.pipeline_mode<synchronous>, transform_indices = @transform_1, window_bounds = array<i64: 16, 32>}, {pipeline_mode = #tpu.pipeline_mode<synchronous>, transform_indices = @transform_2, window_bounds = array<i64: 1, 32>}, {transform_indices = @transform_3, window_bounds = array<i64: 1, 32, 96>}, {transform_indices = @transform_4, window_bounds = array<i64: 1, 1, 96>}, {transform_indices = @transform_5, window_bounds = array<i64: 1, 32, 32>}, {transform_indices = @transform_6, window_bounds = array<i64: 1, 1, 32>}, {transform_indices = @transform_7, window_bounds = array<i64: 1, 1, 32>}, {transform_indices = @transform_8, window_bounds = array<i64: 1, 1, 32>}, {transform_indices = @transform_9, window_bounds = array<i64: 1, 32, 64>}, {transform_indices = @transform_10, window_bounds = array<i64: 1, 1, 64>}, {transform_indices = @transform_11, window_bounds = array<i64: 1, 64, 32>}, {transform_indices = @transform_12, window_bounds = array<i64: 1, 1, 32>}, {transform_indices = @transform_13, window_bounds = array<i64: 1, 1, 32>}, {transform_indices = @transform_14, window_bounds = array<i64: 1, 1, 32>}, {pipeline_mode = #tpu.pipeline_mode<synchronous>, transform_indices = @transform_15, window_bounds = array<i64: 2, 8, 32>}]} {
    %c0_i32 = arith.constant 0 : i32
    %0 = arith.cmpi eq, %arg0, %c0_i32 : i32
    %1 = arith.extui %0 : i1 to i32
    %c0_i32_0 = arith.constant 0 : i32
    %2 = arith.cmpi ne, %1, %c0_i32_0 : i32
    scf.if %2 {
      %c0_64 = arith.constant 0 : index
      %c0_65 = arith.constant 0 : index
      %c0_66 = arith.constant 0 : index
      %207 = vector.load %arg1[%c0_64, %c0_65, %c0_66] : memref<2x8x16xf32, #tpu.memory_space<vmem>>, vector<2x8x16xf32>
      %208 = vector.shape_cast %207 : vector<2x8x16xf32> to vector<16x16xf32>
      %209 = arith.truncf %208 : vector<16x16xf32> to vector<16x16xbf16>
      %c0_67 = arith.constant 0 : index
      %c0_68 = arith.constant 0 : index
      %210 = vector.load %arg2[%c0_67, %c0_68] : memref<16x32xbf16, #tpu.memory_space<vmem>>, vector<16x32xbf16>
      %cst_69 = arith.constant dense<0.000000e+00> : vector<16x32xf32>
      %211 = tpu.matmul %209, %210, %cst_69 {dimension_numbers = #tpu.dot_dimension_numbers<[1], [0], [0], [1], [0, 0, 1, 1], [], []>} : vector<16x16xbf16>, vector<16x32xbf16>, vector<16x32xf32> -> vector<16x32xf32>
      %c0_70 = arith.constant 0 : index
      %c0_71 = arith.constant 0 : index
      %212 = vector.load %arg3[%c0_70, %c0_71] : memref<1x32xf32, #tpu.memory_space<vmem>>, vector<1x32xf32>
      %213 = vector.broadcast %212 : vector<1x32xf32> to vector<16x32xf32>
      %214 = arith.addf %211, %213 : vector<16x32xf32>
      %c0_72 = arith.constant 0 : index
      %c0_73 = arith.constant 0 : index
      %215 = vector.load %arg17[%c0_72, %c0_73] : memref<16x32xf32, #tpu.memory_space<vmem>>, vector<16x32xf32>
      tpu.vector_store %arg17[%c0_72, %c0_73], %214 {strides = array<i32>} : memref<16x32xf32, #tpu.memory_space<vmem>>, vector<16x32xf32>,
    } else {
    }
    %c0 = arith.constant 0 : index
    %c0_1 = arith.constant 0 : index
    %3 = vector.load %arg17[%c0, %c0_1] : memref<16x32xf32, #tpu.memory_space<vmem>>, vector<16x32xf32>
    %4 = arith.truncf %3 : vector<16x32xf32> to vector<16x32xbf16>
    %c0_2 = arith.constant 0 : index
    %c0_3 = arith.constant 0 : index
    %c0_4 = arith.constant 0 : index
    %5 = vector.load %arg4[%c0_2, %c0_3, %c0_4] : memref<1x32x96xbf16, #tpu.memory_space<vmem>>, vector<1x32x96xbf16>
    %6 = vector.shape_cast %5 : vector<1x32x96xbf16> to vector<32x96xbf16>
    %cst = arith.constant dense<0.000000e+00> : vector<16x96xf32>
    %7 = tpu.matmul %4, %6, %cst {dimension_numbers = #tpu.dot_dimension_numbers<[1], [0], [0], [1], [0, 0, 1, 1], [], []>} : vector<16x32xbf16>, vector<32x96xbf16>, vector<16x96xf32> -> vector<16x96xf32>
    %c0_5 = arith.constant 0 : index
    %c0_6 = arith.constant 0 : index
    %c0_7 = arith.constant 0 : index
    %8 = vector.load %arg5[%c0_5, %c0_6, %c0_7] : memref<1x1x96xf32, #tpu.memory_space<vmem>>, vector<1x1x96xf32>
    %9 = vector.shape_cast %8 : vector<1x1x96xf32> to vector<1x96xf32>
    %10 = vector.broadcast %9 : vector<1x96xf32> to vector<16x96xf32>
    %11 = arith.addf %7, %10 : vector<16x96xf32>
    %12 = vector.extract_strided_slice %11 {offsets = [0, 0], sizes = [16, 32], strides = [1, 1]} : vector<16x96xf32> to vector<16x32xf32>
    %cst_8 = arith.constant 0.353553385 : f32
    %13 = vector.broadcast %cst_8 : f32 to vector<16x32xf32>
    %14 = arith.mulf %12, %13 : vector<16x32xf32>
    %15 = arith.truncf %14 : vector<16x32xf32> to vector<16x32xbf16>
    %16 = vector.extract_strided_slice %11 {offsets = [0, 32], sizes = [16, 32], strides = [1, 1]} : vector<16x96xf32> to vector<16x32xf32>
    %17 = arith.truncf %16 : vector<16x32xf32> to vector<16x32xbf16>
    %18 = vector.extract_strided_slice %11 {offsets = [0, 64], sizes = [16, 32], strides = [1, 1]} : vector<16x96xf32> to vector<16x32xf32>
    %19 = arith.truncf %18 : vector<16x32xf32> to vector<16x32xbf16>
    %20 = vector.extract_strided_slice %15 {offsets = [0, 0], sizes = [8, 32], strides = [1, 1]} : vector<16x32xbf16> to vector<8x32xbf16>
    %21 = vector.extract_strided_slice %20 {offsets = [0, 0], sizes = [8, 8], strides = [1, 1]} : vector<8x32xbf16> to vector<8x8xbf16>
    %22 = vector.extract_strided_slice %20 {offsets = [0, 8], sizes = [8, 8], strides = [1, 1]} : vector<8x32xbf16> to vector<8x8xbf16>
    %23 = vector.extract_strided_slice %20 {offsets = [0, 16], sizes = [8, 8], strides = [1, 1]} : vector<8x32xbf16> to vector<8x8xbf16>
    %24 = vector.extract_strided_slice %20 {offsets = [0, 24], sizes = [8, 8], strides = [1, 1]} : vector<8x32xbf16> to vector<8x8xbf16>
    %25 = vector.shape_cast %21 : vector<8x8xbf16> to vector<1x8x8xbf16>
    %26 = vector.shape_cast %22 : vector<8x8xbf16> to vector<1x8x8xbf16>
    %27 = vector.shape_cast %23 : vector<8x8xbf16> to vector<1x8x8xbf16>
    %28 = vector.shape_cast %24 : vector<8x8xbf16> to vector<1x8x8xbf16>
    %29 = tpu.concatenate %25, %26, %27, %28 in 0 : vector<1x8x8xbf16>, vector<1x8x8xbf16>, vector<1x8x8xbf16>, vector<1x8x8xbf16> -> vector<4x8x8xbf16>
    %30 = vector.extract_strided_slice %17 {offsets = [0, 0], sizes = [8, 32], strides = [1, 1]} : vector<16x32xbf16> to vector<8x32xbf16>
    %31 = vector.extract_strided_slice %30 {offsets = [0, 0], sizes = [8, 8], strides = [1, 1]} : vector<8x32xbf16> to vector<8x8xbf16>
    %32 = vector.extract_strided_slice %30 {offsets = [0, 8], sizes = [8, 8], strides = [1, 1]} : vector<8x32xbf16> to vector<8x8xbf16>
    %33 = vector.extract_strided_slice %30 {offsets = [0, 16], sizes = [8, 8], strides = [1, 1]} : vector<8x32xbf16> to vector<8x8xbf16>
    %34 = vector.extract_strided_slice %30 {offsets = [0, 24], sizes = [8, 8], strides = [1, 1]} : vector<8x32xbf16> to vector<8x8xbf16>
    %35 = vector.shape_cast %31 : vector<8x8xbf16> to vector<1x8x8xbf16>
    %36 = vector.shape_cast %32 : vector<8x8xbf16> to vector<1x8x8xbf16>
    %37 = vector.shape_cast %33 : vector<8x8xbf16> to vector<1x8x8xbf16>
    %38 = vector.shape_cast %34 : vector<8x8xbf16> to vector<1x8x8xbf16>
    %39 = tpu.concatenate %35, %36, %37, %38 in 0 : vector<1x8x8xbf16>, vector<1x8x8xbf16>, vector<1x8x8xbf16>, vector<1x8x8xbf16> -> vector<4x8x8xbf16>
    %40 = vector.extract_strided_slice %19 {offsets = [0, 0], sizes = [8, 32], strides = [1, 1]} : vector<16x32xbf16> to vector<8x32xbf16>
    %41 = vector.extract_strided_slice %40 {offsets = [0, 0], sizes = [8, 8], strides = [1, 1]} : vector<8x32xbf16> to vector<8x8xbf16>
    %42 = vector.extract_strided_slice %40 {offsets = [0, 8], sizes = [8, 8], strides = [1, 1]} : vector<8x32xbf16> to vector<8x8xbf16>
    %43 = vector.extract_strided_slice %40 {offsets = [0, 16], sizes = [8, 8], strides = [1, 1]} : vector<8x32xbf16> to vector<8x8xbf16>
    %44 = vector.extract_strided_slice %40 {offsets = [0, 24], sizes = [8, 8], strides = [1, 1]} : vector<8x32xbf16> to vector<8x8xbf16>
    %45 = vector.shape_cast %41 : vector<8x8xbf16> to vector<1x8x8xbf16>
    %46 = vector.shape_cast %42 : vector<8x8xbf16> to vector<1x8x8xbf16>
    %47 = vector.shape_cast %43 : vector<8x8xbf16> to vector<1x8x8xbf16>
    %48 = vector.shape_cast %44 : vector<8x8xbf16> to vector<1x8x8xbf16>
    %49 = tpu.concatenate %45, %46, %47, %48 in 0 : vector<1x8x8xbf16>, vector<1x8x8xbf16>, vector<1x8x8xbf16>, vector<1x8x8xbf16> -> vector<4x8x8xbf16>
    "tpu.trace_start"() <{level = 10 : i32, message = "hqd,hkd->hqk"}> : () -> ()
    %cst_9 = arith.constant dense<0.000000e+00> : vector<4x8x8xf32>
    %50 = tpu.matmul %29, %39, %cst_9 {dimension_numbers = #tpu.dot_dimension_numbers<[2], [2], [1], [1], [0, 0, 0, 1, 1, 1], [0], [0]>} : vector<4x8x8xbf16>, vector<4x8x8xbf16>, vector<4x8x8xf32> -> vector<4x8x8xf32>
    "tpu.trace_stop"() : () -> ()
    %cst_10 = arith.constant dense<0xFF800000> : vector<4x8xf32>
    %51 = vector.multi_reduction <maximumf>, %50, %cst_10 [2] : vector<4x8x8xf32> to vector<4x8xf32>
    %52 = vector.shape_cast %51 : vector<4x8xf32> to vector<4x8x1xf32>
    %53 = vector.broadcast %52 : vector<4x8x1xf32> to vector<4x8x8xf32>
    %54 = arith.subf %50, %53 : vector<4x8x8xf32>
    %55 = math.exp %54 : vector<4x8x8xf32>
    %cst_11 = arith.constant dense<0.000000e+00> : vector<4x8xf32>
    %56 = vector.multi_reduction <add>, %55, %cst_11 [2] : vector<4x8x8xf32> to vector<4x8xf32>
    %57 = vector.shape_cast %56 : vector<4x8xf32> to vector<4x8x1xf32>
    %58 = tpu.reciprocal %57 {approx = true} : vector<4x8x1xf32> -> vector<4x8x1xf32>
    %59 = vector.broadcast %58 : vector<4x8x1xf32> to vector<4x8x8xf32>
    %60 = arith.mulf %55, %59 : vector<4x8x8xf32>
    %61 = arith.truncf %60 : vector<4x8x8xf32> to vector<4x8x8xbf16>
    "tpu.trace_start"() <{level = 10 : i32, message = "hqk,hkd->hqd"}> : () -> ()
    %cst_12 = arith.constant dense<0.000000e+00> : vector<4x8x8xf32>
    %62 = tpu.matmul %61, %49, %cst_12 {dimension_numbers = #tpu.dot_dimension_numbers<[2], [1], [1], [2], [0, 0, 0, 1, 1, 2], [0], [0]>} : vector<4x8x8xbf16>, vector<4x8x8xbf16>, vector<4x8x8xf32> -> vector<4x8x8xf32>
    "tpu.trace_stop"() : () -> ()
    %63 = vector.extract_strided_slice %62 {offsets = [0, 0, 0], sizes = [1, 8, 8], strides = [1, 1, 1]} : vector<4x8x8xf32> to vector<1x8x8xf32>
    %64 = vector.shape_cast %63 : vector<1x8x8xf32> to vector<8x8xf32>
    %65 = vector.extract_strided_slice %62 {offsets = [1, 0, 0], sizes = [1, 8, 8], strides = [1, 1, 1]} : vector<4x8x8xf32> to vector<1x8x8xf32>
    %66 = vector.shape_cast %65 : vector<1x8x8xf32> to vector<8x8xf32>
    %67 = vector.extract_strided_slice %62 {offsets = [2, 0, 0], sizes = [1, 8, 8], strides = [1, 1, 1]} : vector<4x8x8xf32> to vector<1x8x8xf32>
    %68 = vector.shape_cast %67 : vector<1x8x8xf32> to vector<8x8xf32>
    %69 = vector.extract_strided_slice %62 {offsets = [3, 0, 0], sizes = [1, 8, 8], strides = [1, 1, 1]} : vector<4x8x8xf32> to vector<1x8x8xf32>
    %70 = vector.shape_cast %69 : vector<1x8x8xf32> to vector<8x8xf32>
    %71 = tpu.concatenate %64, %66, %68, %70 in 1 : vector<8x8xf32>, vector<8x8xf32>, vector<8x8xf32>, vector<8x8xf32> -> vector<8x32xf32>
    %72 = vector.extract_strided_slice %15 {offsets = [8, 0], sizes = [8, 32], strides = [1, 1]} : vector<16x32xbf16> to vector<8x32xbf16>
    %73 = vector.extract_strided_slice %72 {offsets = [0, 0], sizes = [8, 8], strides = [1, 1]} : vector<8x32xbf16> to vector<8x8xbf16>
    %74 = vector.extract_strided_slice %72 {offsets = [0, 8], sizes = [8, 8], strides = [1, 1]} : vector<8x32xbf16> to vector<8x8xbf16>
    %75 = vector.extract_strided_slice %72 {offsets = [0, 16], sizes = [8, 8], strides = [1, 1]} : vector<8x32xbf16> to vector<8x8xbf16>
    %76 = vector.extract_strided_slice %72 {offsets = [0, 24], sizes = [8, 8], strides = [1, 1]} : vector<8x32xbf16> to vector<8x8xbf16>
    %77 = vector.shape_cast %73 : vector<8x8xbf16> to vector<1x8x8xbf16>
    %78 = vector.shape_cast %74 : vector<8x8xbf16> to vector<1x8x8xbf16>
    %79 = vector.shape_cast %75 : vector<8x8xbf16> to vector<1x8x8xbf16>
    %80 = vector.shape_cast %76 : vector<8x8xbf16> to vector<1x8x8xbf16>
    %81 = tpu.concatenate %77, %78, %79, %80 in 0 : vector<1x8x8xbf16>, vector<1x8x8xbf16>, vector<1x8x8xbf16>, vector<1x8x8xbf16> -> vector<4x8x8xbf16>
    %82 = vector.extract_strided_slice %17 {offsets = [8, 0], sizes = [8, 32], strides = [1, 1]} : vector<16x32xbf16> to vector<8x32xbf16>
    %83 = vector.extract_strided_slice %82 {offsets = [0, 0], sizes = [8, 8], strides = [1, 1]} : vector<8x32xbf16> to vector<8x8xbf16>
    %84 = vector.extract_strided_slice %82 {offsets = [0, 8], sizes = [8, 8], strides = [1, 1]} : vector<8x32xbf16> to vector<8x8xbf16>
    %85 = vector.extract_strided_slice %82 {offsets = [0, 16], sizes = [8, 8], strides = [1, 1]} : vector<8x32xbf16> to vector<8x8xbf16>
    %86 = vector.extract_strided_slice %82 {offsets = [0, 24], sizes = [8, 8], strides = [1, 1]} : vector<8x32xbf16> to vector<8x8xbf16>
    %87 = vector.shape_cast %83 : vector<8x8xbf16> to vector<1x8x8xbf16>
    %88 = vector.shape_cast %84 : vector<8x8xbf16> to vector<1x8x8xbf16>
    %89 = vector.shape_cast %85 : vector<8x8xbf16> to vector<1x8x8xbf16>
    %90 = vector.shape_cast %86 : vector<8x8xbf16> to vector<1x8x8xbf16>
    %91 = tpu.concatenate %87, %88, %89, %90 in 0 : vector<1x8x8xbf16>, vector<1x8x8xbf16>, vector<1x8x8xbf16>, vector<1x8x8xbf16> -> vector<4x8x8xbf16>
    %92 = vector.extract_strided_slice %19 {offsets = [8, 0], sizes = [8, 32], strides = [1, 1]} : vector<16x32xbf16> to vector<8x32xbf16>
    %93 = vector.extract_strided_slice %92 {offsets = [0, 0], sizes = [8, 8], strides = [1, 1]} : vector<8x32xbf16> to vector<8x8xbf16>
    %94 = vector.extract_strided_slice %92 {offsets = [0, 8], sizes = [8, 8], strides = [1, 1]} : vector<8x32xbf16> to vector<8x8xbf16>
    %95 = vector.extract_strided_slice %92 {offsets = [0, 16], sizes = [8, 8], strides = [1, 1]} : vector<8x32xbf16> to vector<8x8xbf16>
    %96 = vector.extract_strided_slice %92 {offsets = [0, 24], sizes = [8, 8], strides = [1, 1]} : vector<8x32xbf16> to vector<8x8xbf16>
    %97 = vector.shape_cast %93 : vector<8x8xbf16> to vector<1x8x8xbf16>
    %98 = vector.shape_cast %94 : vector<8x8xbf16> to vector<1x8x8xbf16>
    %99 = vector.shape_cast %95 : vector<8x8xbf16> to vector<1x8x8xbf16>
    %100 = vector.shape_cast %96 : vector<8x8xbf16> to vector<1x8x8xbf16>
    %101 = tpu.concatenate %97, %98, %99, %100 in 0 : vector<1x8x8xbf16>, vector<1x8x8xbf16>, vector<1x8x8xbf16>, vector<1x8x8xbf16> -> vector<4x8x8xbf16>
    "tpu.trace_start"() <{level = 10 : i32, message = "hqd,hkd->hqk"}> : () -> ()
    %cst_13 = arith.constant dense<0.000000e+00> : vector<4x8x8xf32>
    %102 = tpu.matmul %81, %91, %cst_13 {dimension_numbers = #tpu.dot_dimension_numbers<[2], [2], [1], [1], [0, 0, 0, 1, 1, 1], [0], [0]>} : vector<4x8x8xbf16>, vector<4x8x8xbf16>, vector<4x8x8xf32> -> vector<4x8x8xf32>
    "tpu.trace_stop"() : () -> ()
    %cst_14 = arith.constant dense<0xFF800000> : vector<4x8xf32>
    %103 = vector.multi_reduction <maximumf>, %102, %cst_14 [2] : vector<4x8x8xf32> to vector<4x8xf32>
    %104 = vector.shape_cast %103 : vector<4x8xf32> to vector<4x8x1xf32>
    %105 = vector.broadcast %104 : vector<4x8x1xf32> to vector<4x8x8xf32>
    %106 = arith.subf %102, %105 : vector<4x8x8xf32>
    %107 = math.exp %106 : vector<4x8x8xf32>
    %cst_15 = arith.constant dense<0.000000e+00> : vector<4x8xf32>
    %108 = vector.multi_reduction <add>, %107, %cst_15 [2] : vector<4x8x8xf32> to vector<4x8xf32>
    %109 = vector.shape_cast %108 : vector<4x8xf32> to vector<4x8x1xf32>
    %110 = tpu.reciprocal %109 {approx = true} : vector<4x8x1xf32> -> vector<4x8x1xf32>
    %111 = vector.broadcast %110 : vector<4x8x1xf32> to vector<4x8x8xf32>
    %112 = arith.mulf %107, %111 : vector<4x8x8xf32>
    %113 = arith.truncf %112 : vector<4x8x8xf32> to vector<4x8x8xbf16>
    "tpu.trace_start"() <{level = 10 : i32, message = "hqk,hkd->hqd"}> : () -> ()
    %cst_16 = arith.constant dense<0.000000e+00> : vector<4x8x8xf32>
    %114 = tpu.matmul %113, %101, %cst_16 {dimension_numbers = #tpu.dot_dimension_numbers<[2], [1], [1], [2], [0, 0, 0, 1, 1, 2], [0], [0]>} : vector<4x8x8xbf16>, vector<4x8x8xbf16>, vector<4x8x8xf32> -> vector<4x8x8xf32>
    "tpu.trace_stop"() : () -> ()
    %115 = vector.extract_strided_slice %114 {offsets = [0, 0, 0], sizes = [1, 8, 8], strides = [1, 1, 1]} : vector<4x8x8xf32> to vector<1x8x8xf32>
    %116 = vector.shape_cast %115 : vector<1x8x8xf32> to vector<8x8xf32>
    %117 = vector.extract_strided_slice %114 {offsets = [1, 0, 0], sizes = [1, 8, 8], strides = [1, 1, 1]} : vector<4x8x8xf32> to vector<1x8x8xf32>
    %118 = vector.shape_cast %117 : vector<1x8x8xf32> to vector<8x8xf32>
    %119 = vector.extract_strided_slice %114 {offsets = [2, 0, 0], sizes = [1, 8, 8], strides = [1, 1, 1]} : vector<4x8x8xf32> to vector<1x8x8xf32>
    %120 = vector.shape_cast %119 : vector<1x8x8xf32> to vector<8x8xf32>
    %121 = vector.extract_strided_slice %114 {offsets = [3, 0, 0], sizes = [1, 8, 8], strides = [1, 1, 1]} : vector<4x8x8xf32> to vector<1x8x8xf32>
    %122 = vector.shape_cast %121 : vector<1x8x8xf32> to vector<8x8xf32>
    %123 = tpu.concatenate %116, %118, %120, %122 in 1 : vector<8x8xf32>, vector<8x8xf32>, vector<8x8xf32>, vector<8x8xf32> -> vector<8x32xf32>
    %124 = tpu.concatenate %71, %123 in 0 : vector<8x32xf32>, vector<8x32xf32> -> vector<16x32xf32>
    %125 = arith.truncf %124 : vector<16x32xf32> to vector<16x32xbf16>
    %c0_17 = arith.constant 0 : index
    %c0_18 = arith.constant 0 : index
    %c0_19 = arith.constant 0 : index
    %126 = vector.load %arg6[%c0_17, %c0_18, %c0_19] : memref<1x32x32xbf16, #tpu.memory_space<vmem>>, vector<1x32x32xbf16>
    %127 = vector.shape_cast %126 : vector<1x32x32xbf16> to vector<32x32xbf16>
    %cst_20 = arith.constant dense<0.000000e+00> : vector<16x32xf32>
    %128 = tpu.matmul %125, %127, %cst_20 {dimension_numbers = #tpu.dot_dimension_numbers<[1], [0], [0], [1], [0, 0, 1, 1], [], []>} : vector<16x32xbf16>, vector<32x32xbf16>, vector<16x32xf32> -> vector<16x32xf32>
    %c0_21 = arith.constant 0 : index
    %c0_22 = arith.constant 0 : index
    %c0_23 = arith.constant 0 : index
    %129 = vector.load %arg7[%c0_21, %c0_22, %c0_23] : memref<1x1x32xf32, #tpu.memory_space<vmem>>, vector<1x1x32xf32>
    %130 = vector.shape_cast %129 : vector<1x1x32xf32> to vector<1x32xf32>
    %131 = vector.broadcast %130 : vector<1x32xf32> to vector<16x32xf32>
    %132 = arith.addf %128, %131 : vector<16x32xf32>
    %133 = arith.addf %3, %132 : vector<16x32xf32>
    %c0_24 = arith.constant 0 : index
    %c0_25 = arith.constant 0 : index
    %c0_26 = arith.constant 0 : index
    %134 = vector.load %arg8[%c0_24, %c0_25, %c0_26] : memref<1x1x32xf32, #tpu.memory_space<vmem>>, vector<1x1x32xf32>
    %135 = vector.shape_cast %134 : vector<1x1x32xf32> to vector<1x32xf32>
    %c0_27 = arith.constant 0 : index
    %c0_28 = arith.constant 0 : index
    %c0_29 = arith.constant 0 : index
    %136 = vector.load %arg9[%c0_27, %c0_28, %c0_29] : memref<1x1x32xf32, #tpu.memory_space<vmem>>, vector<1x1x32xf32>
    %137 = vector.shape_cast %136 : vector<1x1x32xf32> to vector<1x32xf32>
    %cst_30 = arith.constant dense<0.000000e+00> : vector<16xf32>
    %138 = vector.multi_reduction <add>, %133, %cst_30 [1] : vector<16x32xf32> to vector<16xf32>
    %139 = vector.shape_cast %138 : vector<16xf32> to vector<16x1xf32>
    %cst_31 = arith.constant 3.200000e+01 : f32
    %140 = vector.broadcast %cst_31 : f32 to vector<16x1xf32>
    %141 = arith.divf %139, %140 : vector<16x1xf32>
    %142 = vector.broadcast %141 : vector<16x1xf32> to vector<16x32xf32>
    %143 = arith.subf %133, %142 : vector<16x32xf32>
    %144 = arith.mulf %143, %143 : vector<16x32xf32>
    %cst_32 = arith.constant dense<0.000000e+00> : vector<16xf32>
    %145 = vector.multi_reduction <add>, %144, %cst_32 [1] : vector<16x32xf32> to vector<16xf32>
    %146 = vector.shape_cast %145 : vector<16xf32> to vector<16x1xf32>
    %cst_33 = arith.constant 0.0322580636 : f32
    %147 = vector.broadcast %cst_33 : f32 to vector<16x1xf32>
    %148 = arith.mulf %146, %147 : vector<16x1xf32>
    %149 = math.sqrt %148 : vector<16x1xf32>
    %cst_34 = arith.constant 9.99999996E-13 : f32
    %150 = vector.broadcast %cst_34 : f32 to vector<16x1xf32>
    %151 = arith.addf %149, %150 : vector<16x1xf32>
    %152 = tpu.reciprocal %151 : vector<16x1xf32> -> vector<16x1xf32>
    %153 = vector.broadcast %152 : vector<16x1xf32> to vector<16x32xf32>
    %154 = arith.mulf %143, %153 : vector<16x32xf32>
    %155 = vector.broadcast %135 : vector<1x32xf32> to vector<16x32xf32>
    %156 = arith.mulf %155, %154 : vector<16x32xf32>
    %157 = vector.broadcast %137 : vector<1x32xf32> to vector<16x32xf32>
    %158 = arith.addf %156, %157 : vector<16x32xf32>
    %159 = arith.truncf %158 : vector<16x32xf32> to vector<16x32xbf16>
    %c0_35 = arith.constant 0 : index
    %c0_36 = arith.constant 0 : index
    %c0_37 = arith.constant 0 : index
    %160 = vector.load %arg10[%c0_35, %c0_36, %c0_37] : memref<1x32x64xbf16, #tpu.memory_space<vmem>>, vector<1x32x64xbf16>
    %161 = vector.shape_cast %160 : vector<1x32x64xbf16> to vector<32x64xbf16>
    %cst_38 = arith.constant dense<0.000000e+00> : vector<16x64xf32>
    %162 = tpu.matmul %159, %161, %cst_38 {dimension_numbers = #tpu.dot_dimension_numbers<[1], [0], [0], [1], [0, 0, 1, 1], [], []>} : vector<16x32xbf16>, vector<32x64xbf16>, vector<16x64xf32> -> vector<16x64xf32>
    %c0_39 = arith.constant 0 : index
    %c0_40 = arith.constant 0 : index
    %c0_41 = arith.constant 0 : index
    %163 = vector.load %arg11[%c0_39, %c0_40, %c0_41] : memref<1x1x64xf32, #tpu.memory_space<vmem>>, vector<1x1x64xf32>
    %164 = vector.shape_cast %163 : vector<1x1x64xf32> to vector<1x64xf32>
    %165 = vector.broadcast %164 : vector<1x64xf32> to vector<16x64xf32>
    %166 = arith.addf %162, %165 : vector<16x64xf32>
    %cst_42 = arith.constant 0.000000e+00 : f32
    %167 = vector.broadcast %cst_42 : f32 to vector<16x64xf32>
    %168 = arith.maximumf %166, %167 : vector<16x64xf32>
    %169 = arith.truncf %168 : vector<16x64xf32> to vector<16x64xbf16>
    %c0_43 = arith.constant 0 : index
    %c0_44 = arith.constant 0 : index
    %c0_45 = arith.constant 0 : index
    %170 = vector.load %arg12[%c0_43, %c0_44, %c0_45] : memref<1x64x32xbf16, #tpu.memory_space<vmem>>, vector<1x64x32xbf16>
    %171 = vector.shape_cast %170 : vector<1x64x32xbf16> to vector<64x32xbf16>
    %cst_46 = arith.constant dense<0.000000e+00> : vector<16x32xf32>
    %172 = tpu.matmul %169, %171, %cst_46 {dimension_numbers = #tpu.dot_dimension_numbers<[1], [0], [0], [1], [0, 0, 1, 1], [], []>} : vector<16x64xbf16>, vector<64x32xbf16>, vector<16x32xf32> -> vector<16x32xf32>
    %c0_47 = arith.constant 0 : index
    %c0_48 = arith.constant 0 : index
    %c0_49 = arith.constant 0 : index
    %173 = vector.load %arg13[%c0_47, %c0_48, %c0_49] : memref<1x1x32xf32, #tpu.memory_space<vmem>>, vector<1x1x32xf32>
    %174 = vector.shape_cast %173 : vector<1x1x32xf32> to vector<1x32xf32>
    %175 = vector.broadcast %174 : vector<1x32xf32> to vector<16x32xf32>
    %176 = arith.addf %172, %175 : vector<16x32xf32>
    %177 = arith.addf %158, %176 : vector<16x32xf32>
    %c0_50 = arith.constant 0 : index
    %c0_51 = arith.constant 0 : index
    %c0_52 = arith.constant 0 : index
    %178 = vector.load %arg14[%c0_50, %c0_51, %c0_52] : memref<1x1x32xf32, #tpu.memory_space<vmem>>, vector<1x1x32xf32>
    %179 = vector.shape_cast %178 : vector<1x1x32xf32> to vector<1x32xf32>
    %c0_53 = arith.constant 0 : index
    %c0_54 = arith.constant 0 : index
    %c0_55 = arith.constant 0 : index
    %180 = vector.load %arg15[%c0_53, %c0_54, %c0_55] : memref<1x1x32xf32, #tpu.memory_space<vmem>>, vector<1x1x32xf32>
    %181 = vector.shape_cast %180 : vector<1x1x32xf32> to vector<1x32xf32>
    %cst_56 = arith.constant dense<0.000000e+00> : vector<16xf32>
    %182 = vector.multi_reduction <add>, %177, %cst_56 [1] : vector<16x32xf32> to vector<16xf32>
    %183 = vector.shape_cast %182 : vector<16xf32> to vector<16x1xf32>
    %cst_57 = arith.constant 3.200000e+01 : f32
    %184 = vector.broadcast %cst_57 : f32 to vector<16x1xf32>
    %185 = arith.divf %183, %184 : vector<16x1xf32>
    %186 = vector.broadcast %185 : vector<16x1xf32> to vector<16x32xf32>
    %187 = arith.subf %177, %186 : vector<16x32xf32>
    %188 = arith.mulf %187, %187 : vector<16x32xf32>
    %cst_58 = arith.constant dense<0.000000e+00> : vector<16xf32>
    %189 = vector.multi_reduction <add>, %188, %cst_58 [1] : vector<16x32xf32> to vector<16xf32>
    %190 = vector.shape_cast %189 : vector<16xf32> to vector<16x1xf32>
    %cst_59 = arith.constant 0.0322580636 : f32
    %191 = vector.broadcast %cst_59 : f32 to vector<16x1xf32>
    %192 = arith.mulf %190, %191 : vector<16x1xf32>
    %193 = math.sqrt %192 : vector<16x1xf32>
    %cst_60 = arith.constant 9.99999996E-13 : f32
    %194 = vector.broadcast %cst_60 : f32 to vector<16x1xf32>
    %195 = arith.addf %193, %194 : vector<16x1xf32>
    %196 = tpu.reciprocal %195 : vector<16x1xf32> -> vector<16x1xf32>
    %197 = vector.broadcast %196 : vector<16x1xf32> to vector<16x32xf32>
    %198 = arith.mulf %187, %197 : vector<16x32xf32>
    %199 = vector.broadcast %179 : vector<1x32xf32> to vector<16x32xf32>
    %200 = arith.mulf %199, %198 : vector<16x32xf32>
    %201 = vector.broadcast %181 : vector<1x32xf32> to vector<16x32xf32>
    %202 = arith.addf %200, %201 : vector<16x32xf32>
    %c0_61 = arith.constant 0 : index
    %c0_62 = arith.constant 0 : index
    %203 = vector.load %arg17[%c0_61, %c0_62] : memref<16x32xf32, #tpu.memory_space<vmem>>, vector<16x32xf32>
    tpu.vector_store %arg17[%c0_61, %c0_62], %202 {strides = array<i32>} : memref<16x32xf32, #tpu.memory_space<vmem>>, vector<16x32xf32>,
    %c1_i32 = arith.constant 1 : i32
    %204 = arith.cmpi eq, %arg0, %c1_i32 : i32
    %205 = arith.extui %204 : i1 to i32
    %c0_i32_63 = arith.constant 0 : i32
    %206 = arith.cmpi ne, %205, %c0_i32_63 : i32
    scf.if %206 {
      %207 = vector.shape_cast %202 : vector<16x32xf32> to vector<2x8x32xf32>
      %c0_64 = arith.constant 0 : index
      %c0_65 = arith.constant 0 : index
      %c0_66 = arith.constant 0 : index
      %208 = vector.load %arg16[%c0_64, %c0_65, %c0_66] : memref<2x8x32xf32, #tpu.memory_space<vmem>>, vector<2x8x32xf32>
      tpu.vector_store %arg16[%c0_64, %c0_65, %c0_66], %207 {strides = array<i32>} : memref<2x8x32xf32, #tpu.memory_space<vmem>>, vector<2x8x32xf32>,
    } else {
    }
    return
  }
  func.func @transform_0(%arg0: i32) -> (i32, i32, i32) {
    %c0_i32 = arith.constant 0 : i32
    %c0_i32_0 = arith.constant 0 : i32
    %c0_i32_1 = arith.constant 0 : i32
    %c0_i32_2 = arith.constant 0 : i32
    return %c0_i32, %c0_i32_0, %c0_i32_1 : i32, i32, i32
  }
  func.func @transform_1(%arg0: i32) -> (i32, i32) {
    %c0_i32 = arith.constant 0 : i32
    %c0_i32_0 = arith.constant 0 : i32
    %c0_i32_1 = arith.constant 0 : i32
    return %c0_i32, %c0_i32_0 : i32, i32
  }
  func.func @transform_2(%arg0: i32) -> (i32, i32) {
    %c0_i32 = arith.constant 0 : i32
    %c0_i32_0 = arith.constant 0 : i32
    %c0_i32_1 = arith.constant 0 : i32
    return %c0_i32, %c0_i32_0 : i32, i32
  }
  func.func @transform_3(%arg0: i32) -> (i32, i32, i32) {
    %c0_i32 = arith.constant 0 : i32
    %c0_i32_0 = arith.constant 0 : i32
    %c0_i32_1 = arith.constant 0 : i32
    return %arg0, %c0_i32, %c0_i32_0 : i32, i32, i32
  }
  func.func @transform_4(%arg0: i32) -> (i32, i32, i32) {
    %c0_i32 = arith.constant 0 : i32
    %c0_i32_0 = arith.constant 0 : i32
    %c0_i32_1 = arith.constant 0 : i32
    return %arg0, %c0_i32, %c0_i32_0 : i32, i32, i32
  }
  func.func @transform_5(%arg0: i32) -> (i32, i32, i32) {
    %c0_i32 = arith.constant 0 : i32
    %c0_i32_0 = arith.constant 0 : i32
    %c0_i32_1 = arith.constant 0 : i32
    return %arg0, %c0_i32, %c0_i32_0 : i32, i32, i32
  }
  func.func @transform_6(%arg0: i32) -> (i32, i32, i32) {
    %c0_i32 = arith.constant 0 : i32
    %c0_i32_0 = arith.constant 0 : i32
    %c0_i32_1 = arith.constant 0 : i32
    return %arg0, %c0_i32, %c0_i32_0 : i32, i32, i32
  }
  func.func @transform_7(%arg0: i32) -> (i32, i32, i32) {
    %c0_i32 = arith.constant 0 : i32
    %c0_i32_0 = arith.constant 0 : i32
    %c0_i32_1 = arith.constant 0 : i32
    return %arg0, %c0_i32, %c0_i32_0 : i32, i32, i32
  }
  func.func @transform_8(%arg0: i32) -> (i32, i32, i32) {
    %c0_i32 = arith.constant 0 : i32
    %c0_i32_0 = arith.constant 0 : i32
    %c0_i32_1 = arith.constant 0 : i32
    return %arg0, %c0_i32, %c0_i32_0 : i32, i32, i32
  }
  func.func @transform_9(%arg0: i32) -> (i32, i32, i32) {
    %c0_i32 = arith.constant 0 : i32
    %c0_i32_0 = arith.constant 0 : i32
    %c0_i32_1 = arith.constant 0 : i32
    return %arg0, %c0_i32, %c0_i32_0 : i32, i32, i32
  }
  func.func @transform_10(%arg0: i32) -> (i32, i32, i32) {
    %c0_i32 = arith.constant 0 : i32
    %c0_i32_0 = arith.constant 0 : i32
    %c0_i32_1 = arith.constant 0 : i32
    return %arg0, %c0_i32, %c0_i32_0 : i32, i32, i32
  }
  func.func @transform_11(%arg0: i32) -> (i32, i32, i32) {
    %c0_i32 = arith.constant 0 : i32
    %c0_i32_0 = arith.constant 0 : i32
    %c0_i32_1 = arith.constant 0 : i32
    return %arg0, %c0_i32, %c0_i32_0 : i32, i32, i32
  }
  func.func @transform_12(%arg0: i32) -> (i32, i32, i32) {
    %c0_i32 = arith.constant 0 : i32
    %c0_i32_0 = arith.constant 0 : i32
    %c0_i32_1 = arith.constant 0 : i32
    return %arg0, %c0_i32, %c0_i32_0 : i32, i32, i32
  }
  func.func @transform_13(%arg0: i32) -> (i32, i32, i32) {
    %c0_i32 = arith.constant 0 : i32
    %c0_i32_0 = arith.constant 0 : i32
    %c0_i32_1 = arith.constant 0 : i32
    return %arg0, %c0_i32, %c0_i32_0 : i32, i32, i32
  }
  func.func @transform_14(%arg0: i32) -> (i32, i32, i32) {
    %c0_i32 = arith.constant 0 : i32
    %c0_i32_0 = arith.constant 0 : i32
    %c0_i32_1 = arith.constant 0 : i32
    return %arg0, %c0_i32, %c0_i32_0 : i32, i32, i32
  }
  func.func @transform_15(%arg0: i32) -> (i32, i32, i32) {
    %c0_i32 = arith.constant 0 : i32
    %c0_i32_0 = arith.constant 0 : i32
    %c0_i32_1 = arith.constant 0 : i32
    %c0_i32_2 = arith.constant 0 : i32
    return %c0_i32, %c0_i32_0, %c0_i32_1 : i32, i32, i32
  }
}

</mosaic_0001>

<llo_original>
// kernel: tpu_custom_call.1
$region0: #{tpu_custom_call.1}
  #allocation0 [shape = 'u32[]', space=smem, size = 0x4, offset = 0x4, fixed_abs, tag = 'smem constant byte address 0x4 - core index']
  #allocation1 [shape = 'u32[72,128]{1,0:T(1,128)}', space=vmem, size = 0x9000, scoped, tag = 'internal scratch']
  #allocation2 [shape = 'f32[16,32]{1,0:T(8,128)}', space=vmem, size = 0x2000, scoped, tag = 'scratch operand']
  %s0 = inlined_call_operand.hbm [shape: f32[2,8,16], index: 0, kind: input, shape index: {}]
  %s1 = inlined_call_operand.hbm [shape: bf16[16,32], index: 1, kind: input, shape index: {}]
  %s2 = inlined_call_operand.vmem [shape: f32[1,32], index: 2, kind: input, shape index: {}]
  %s3 = inlined_call_operand.vmem [shape: bf16[2,32,96], index: 3, kind: input, shape index: {}]
  %s4 = inlined_call_operand.vmem [shape: f32[2,1,96], index: 4, kind: input, shape index: {}]
  %s5 = inlined_call_operand.vmem [shape: bf16[2,32,32], index: 5, kind: input, shape index: {}]
  %s6 = inlined_call_operand.vmem [shape: f32[2,1,32], index: 6, kind: input, shape index: {}]
  %s7 = inlined_call_operand.hbm [shape: f32[2,1,32], index: 7, kind: input, shape index: {}]
  %s8 = inlined_call_operand.vmem [shape: f32[2,1,32], index: 8, kind: input, shape index: {}]
  %s9 = inlined_call_operand.vmem [shape: bf16[2,32,64], index: 9, kind: input, shape index: {}]
  %s10 = inlined_call_operand.vmem [shape: f32[2,1,64], index: 10, kind: input, shape index: {}]
  %s11 = inlined_call_operand.vmem [shape: bf16[2,64,32], index: 11, kind: input, shape index: {}]
  %s12 = inlined_call_operand.vmem [shape: f32[2,1,32], index: 12, kind: input, shape index: {}]
  %s13 = inlined_call_operand.hbm [shape: f32[2,1,32], index: 13, kind: input, shape index: {}]
  %s14 = inlined_call_operand.vmem [shape: f32[2,1,32], index: 14, kind: input, shape index: {}]
  %s15 = inlined_call_operand.hbm [shape: f32[2,8,32], index: 15, kind: output, shape index: {}]
  %s16 = sld [smem:[#allocation0]]
  $region117: #{tpu_custom_call.1} parent=0
    _
  %s18 = ssub.s32 1, %s16
  %s19 = scalar_select 0, %s18, %s16
  $region1: #{tpu_custom_call.1} parent=0
    #allocation3 [shape = 'u8[8192]{0}', space=vmem, size = 0x2000, scoped, tag = 'input window, operand 0, single buffered']
    #allocation4 [shape = 's32[2]{0}', space=sflag, size = 0x8, scoped, tag = 'scoped memory for tpu_custom_call.1']
    #allocation5 [shape = 's32[2]{0}', space=sflag, size = 0x8, scoped, tag = 'scoped memory for tpu_custom_call.1']
    #allocation6 [shape = 'u8[4096]{0}', space=vmem, size = 0x1000, scoped, tag = 'input window, operand 1, single buffered']
    #allocation7 [shape = 's32[1]{0}', space=sflag, size = 0x4, scoped, tag = 'scoped memory for tpu_custom_call.1']
    #allocation8 [shape = 'u8[1024]{0}', space=vmem, size = 0x400, scoped, tag = 'input window, operand 7']
    #allocation9 [shape = 'u8[1024]{0}', space=vmem, size = 0x400, scoped, tag = 'input window, operand 13']
    #allocation10 [shape = 'u8[8192]{0}', space=vmem, size = 0x2000, scoped, tag = 'output window, operand 0, single buffered']
    %20 = vsyncpa [#allocation4], 0
    %21 = vsyncpa [#allocation7], 0
    %22 = vsyncpa [#allocation5], 0
    loop: start=0, step=1, limit=4
    $region2: #{tpu_custom_call.1} parent=1 // loop_pre_header
      _
    $region3: #{tpu_custom_call.1} parent=1 // loop_header
      %s24 = sphi 0, %s28
      %p25 = scmp.ge.s32.totalorder %s24, 4
      %s32 = sphi 0, %s32
      %s34 = sphi 0, %s32
      %s35 = sphi 0, %s34
      %s49 = sphi 0, %s35
      %s53 = sphi 0, %s53
      %s55 = sphi 0, %s53
      %s56 = sphi 0, %s55
      %s70 = sphi 0, %s56
      %s74 = sphi 0, %s74
      %s76 = sphi 0, %s74
      %s77 = sphi 0, %s76
      %s91 = sphi 0, %s77
      %s97 = sphi 0, %s99
      %s100 = sphi 0, %s97
      %s101 = sphi 0, %s100
      %s117 = sphi 0, %s101
      %s123 = sphi 0, %s125
      %s126 = sphi 0, %s123
      %s127 = sphi 0, %s126
      %s143 = sphi 0, %s127
      %s149 = sphi 0, %s151
      %s152 = sphi 0, %s149
      %s153 = sphi 0, %s152
      %s169 = sphi 0, %s153
      %s175 = sphi 0, %s177
      %s178 = sphi 0, %s175
      %s179 = sphi 0, %s178
      %s195 = sphi 0, %s179
      %s201 = sphi 0, %s203
      %s204 = sphi 0, %s201
      %s205 = sphi 0, %s204
      %s221 = sphi 0, %s205
      %s227 = sphi 0, %s229
      %s230 = sphi 0, %s227
      %s231 = sphi 0, %s230
      %s247 = sphi 0, %s231
      %s253 = sphi 0, %s255
      %s256 = sphi 0, %s253
      %s257 = sphi 0, %s256
      %s273 = sphi 0, %s257
      %s279 = sphi 0, %s281
      %s282 = sphi 0, %s279
      %s283 = sphi 0, %s282
      %s299 = sphi 0, %s283
      %s305 = sphi 0, %s307
      %s308 = sphi 0, %s305
      %s309 = sphi 0, %s308
      %s325 = sphi 0, %s309
      %s331 = sphi 0, %s333
      %s334 = sphi 0, %s331
      %s335 = sphi 0, %s334
      %s351 = sphi 0, %s335
      %s357 = sphi 0, %s359
      %s360 = sphi 0, %s357
      %s361 = sphi 0, %s360
      %s377 = sphi 0, %s361
      %s383 = sphi 0, %s385
      %s386 = sphi 0, %s383
      %s387 = sphi 0, %s386
      %s403 = sphi 0, %s387
      %s407 = sphi 0, %s407
      %s409 = sphi 0, %s407
      %s410 = sphi 0, %s409
      %s424 = sphi 0, %s410
    $region4: #{tpu_custom_call.1} parent=1 // loop_header_branch
      %27 = sbr.rel (%p25) target = $region8
    $region5: #{tpu_custom_call.1} parent=1 // loop_body
      %s29 = ssub.s32 %s24, 1
      %s30 = ssub.s32 %s24, 2
      %s31 = sadd.s32 %s24, 1
      %s33 = sadd.s32 %s32, 1
      %p36 = scmp.eq.s32.totalorder %s24, 1
      %p37 = scmp.ne.s32.totalorder %s32, %s34
      %p38 = scmp.eq.s32.totalorder %s24, 0
      %p39 = por %p37, %p38
      %p40 = scmp.ne.s32.totalorder %s32, %s34
      %p41 = scmp.eq.s32.totalorder %s29, 1
      %p42 = por %p40, %p41
      %p43 = scmp.ne.s32.totalorder %s34, %s35
      %p44 = scmp.eq.s32.totalorder %s29, 0
      %p45 = por %p43, %p44
      %p46 = scmp.ne.s32.totalorder %s34, %s35
      %p47 = scmp.eq.s32.totalorder %s30, 1
      %p48 = por %p46, %p47
      %p50 = scmp.ne.s32.totalorder %s35, %s49
      %p51 = scmp.eq.s32.totalorder %s30, 0
      %p52 = por %p50, %p51
      %s54 = sadd.s32 %s53, 1
      %p57 = scmp.eq.s32.totalorder %s24, 1
      %p58 = scmp.ne.s32.totalorder %s53, %s55
      %p59 = scmp.eq.s32.totalorder %s24, 0
      %p60 = por %p58, %p59
      %p61 = scmp.ne.s32.totalorder %s53, %s55
      %p62 = scmp.eq.s32.totalorder %s29, 1
      %p63 = por %p61, %p62
      %p64 = scmp.ne.s32.totalorder %s55, %s56
      %p65 = scmp.eq.s32.totalorder %s29, 0
      %p66 = por %p64, %p65
      %p67 = scmp.ne.s32.totalorder %s55, %s56
      %p68 = scmp.eq.s32.totalorder %s30, 1
      %p69 = por %p67, %p68
      %p71 = scmp.ne.s32.totalorder %s56, %s70
      %p72 = scmp.eq.s32.totalorder %s30, 0
      %p73 = por %p71, %p72
      %s75 = sadd.s32 %s74, 1
      %p78 = scmp.eq.s32.totalorder %s24, 1
      %p79 = scmp.ne.s32.totalorder %s74, %s76
      %p80 = scmp.eq.s32.totalorder %s24, 0
      %p81 = por %p79, %p80
      %p82 = scmp.ne.s32.totalorder %s74, %s76
      %p83 = scmp.eq.s32.totalorder %s29, 1
      %p84 = por %p82, %p83
      %p85 = scmp.ne.s32.totalorder %s76, %s77
      %p86 = scmp.eq.s32.totalorder %s29, 0
      %p87 = por %p85, %p86
      %p88 = scmp.ne.s32.totalorder %s76, %s77
      %p89 = scmp.eq.s32.totalorder %s30, 1
      %p90 = por %p88, %p89
      %p92 = scmp.ne.s32.totalorder %s77, %s91
      %p93 = scmp.eq.s32.totalorder %s30, 0
      %p94 = por %p92, %p93
      %s95 = ssub.s32 %s24, %s31
      %p96 = scmp.eq.s32.totalorder %s95, 0
      %s98 = sadd.s32 %s97, 1
      %s99 = scalar_select %p96, %s97, %s98
      %p102 = pneg %p96
      %p103 = scmp.eq.s32.totalorder %s24, 1
      %p104 = por %p102, %p103
      %p105 = scmp.ne.s32.totalorder %s97, %s100
      %p106 = scmp.eq.s32.totalorder %s24, 0
      %p107 = por %p105, %p106
      %p108 = scmp.ne.s32.totalorder %s97, %s100
      %p109 = scmp.eq.s32.totalorder %s29, 1
      %p110 = por %p108, %p109
      %p111 = scmp.ne.s32.totalorder %s100, %s101
      %p112 = scmp.eq.s32.totalorder %s29, 0
      %p113 = por %p111, %p112
      %p114 = scmp.ne.s32.totalorder %s100, %s101
      %p115 = scmp.eq.s32.totalorder %s30, 1
      %p116 = por %p114, %p115
      %p118 = scmp.ne.s32.totalorder %s101, %s117
      %p119 = scmp.eq.s32.totalorder %s30, 0
      %p120 = por %p118, %p119
      %s121 = ssub.s32 %s24, %s31
      %p122 = scmp.eq.s32.totalorder %s121, 0
      %s124 = sadd.s32 %s123, 1
      %s125 = scalar_select %p122, %s123, %s124
      %p128 = pneg %p122
      %p129 = scmp.eq.s32.totalorder %s24, 1
      %p130 = por %p128, %p129
      %p131 = scmp.ne.s32.totalorder %s123, %s126
      %p132 = scmp.eq.s32.totalorder %s24, 0
      %p133 = por %p131, %p132
      %p134 = scmp.ne.s32.totalorder %s123, %s126
      %p135 = scmp.eq.s32.totalorder %s29, 1
      %p136 = por %p134, %p135
      %p137 = scmp.ne.s32.totalorder %s126, %s127
      %p138 = scmp.eq.s32.totalorder %s29, 0
      %p139 = por %p137, %p138
      %p140 = scmp.ne.s32.totalorder %s126, %s127
      %p141 = scmp.eq.s32.totalorder %s30, 1
      %p142 = por %p140, %p141
      %p144 = scmp.ne.s32.totalorder %s127, %s143
      %p145 = scmp.eq.s32.totalorder %s30, 0
      %p146 = por %p144, %p145
      %s147 = ssub.s32 %s24, %s31
      %p148 = scmp.eq.s32.totalorder %s147, 0
      %s150 = sadd.s32 %s149, 1
      %s151 = scalar_select %p148, %s149, %s150
      %p154 = pneg %p148
      %p155 = scmp.eq.s32.totalorder %s24, 1
      %p156 = por %p154, %p155
      %p157 = scmp.ne.s32.totalorder %s149, %s152
      %p158 = scmp.eq.s32.totalorder %s24, 0
      %p159 = por %p157, %p158
      %p160 = scmp.ne.s32.totalorder %s149, %s152
      %p161 = scmp.eq.s32.totalorder %s29, 1
      %p162 = por %p160, %p161
      %p163 = scmp.ne.s32.totalorder %s152, %s153
      %p164 = scmp.eq.s32.totalorder %s29, 0
      %p165 = por %p163, %p164
      %p166 = scmp.ne.s32.totalorder %s152, %s153
      %p167 = scmp.eq.s32.totalorder %s30, 1
      %p168 = por %p166, %p167
      %p170 = scmp.ne.s32.totalorder %s153, %s169
      %p171 = scmp.eq.s32.totalorder %s30, 0
      %p172 = por %p170, %p171
      %s173 = ssub.s32 %s24, %s31
      %p174 = scmp.eq.s32.totalorder %s173, 0
      %s176 = sadd.s32 %s175, 1
      %s177 = scalar_select %p174, %s175, %s176
      %p180 = pneg %p174
      %p181 = scmp.eq.s32.totalorder %s24, 1
      %p182 = por %p180, %p181
      %p183 = scmp.ne.s32.totalorder %s175, %s178
      %p184 = scmp.eq.s32.totalorder %s24, 0
      %p185 = por %p183, %p184
      %p186 = scmp.ne.s32.totalorder %s175, %s178
      %p187 = scmp.eq.s32.totalorder %s29, 1
      %p188 = por %p186, %p187
      %p189 = scmp.ne.s32.totalorder %s178, %s179
      %p190 = scmp.eq.s32.totalorder %s29, 0
      %p191 = por %p189, %p190
      %p192 = scmp.ne.s32.totalorder %s178, %s179
      %p193 = scmp.eq.s32.totalorder %s30, 1
      %p194 = por %p192, %p193
      %p196 = scmp.ne.s32.totalorder %s179, %s195
      %p197 = scmp.eq.s32.totalorder %s30, 0
      %p198 = por %p196, %p197
      %s199 = ssub.s32 %s24, %s31
      %p200 = scmp.eq.s32.totalorder %s199, 0
      %s202 = sadd.s32 %s201, 1
      %s203 = scalar_select %p200, %s201, %s202
      %p206 = pneg %p200
      %p207 = scmp.eq.s32.totalorder %s24, 1
      %p208 = por %p206, %p207
      %p209 = scmp.ne.s32.totalorder %s201, %s204
      %p210 = scmp.eq.s32.totalorder %s24, 0
      %p211 = por %p209, %p210
      %p212 = scmp.ne.s32.totalorder %s201, %s204
      %p213 = scmp.eq.s32.totalorder %s29, 1
      %p214 = por %p212, %p213
      %p215 = scmp.ne.s32.totalorder %s204, %s205
      %p216 = scmp.eq.s32.totalorder %s29, 0
      %p217 = por %p215, %p216
      %p218 = scmp.ne.s32.totalorder %s204, %s205
      %p219 = scmp.eq.s32.totalorder %s30, 1
      %p220 = por %p218, %p219
      %p222 = scmp.ne.s32.totalorder %s205, %s221
      %p223 = scmp.eq.s32.totalorder %s30, 0
      %p224 = por %p222, %p223
      %s225 = ssub.s32 %s24, %s31
      %p226 = scmp.eq.s32.totalorder %s225, 0
      %s228 = sadd.s32 %s227, 1
      %s229 = scalar_select %p226, %s227, %s228
      %p232 = pneg %p226
      %p233 = scmp.eq.s32.totalorder %s24, 1
      %p234 = por %p232, %p233
      %p235 = scmp.ne.s32.totalorder %s227, %s230
      %p236 = scmp.eq.s32.totalorder %s24, 0
      %p237 = por %p235, %p236
      %p238 = scmp.ne.s32.totalorder %s227, %s230
      %p239 = scmp.eq.s32.totalorder %s29, 1
      %p240 = por %p238, %p239
      %p241 = scmp.ne.s32.totalorder %s230, %s231
      %p242 = scmp.eq.s32.totalorder %s29, 0
      %p243 = por %p241, %p242
      %p244 = scmp.ne.s32.totalorder %s230, %s231
      %p245 = scmp.eq.s32.totalorder %s30, 1
      %p246 = por %p244, %p245
      %p248 = scmp.ne.s32.totalorder %s231, %s247
      %p249 = scmp.eq.s32.totalorder %s30, 0
      %p250 = por %p248, %p249
      %s251 = ssub.s32 %s24, %s31
      %p252 = scmp.eq.s32.totalorder %s251, 0
      %s254 = sadd.s32 %s253, 1
      %s255 = scalar_select %p252, %s253, %s254
      %p258 = pneg %p252
      %p259 = scmp.eq.s32.totalorder %s24, 1
      %p260 = por %p258, %p259
      %p261 = scmp.ne.s32.totalorder %s253, %s256
      %p262 = scmp.eq.s32.totalorder %s24, 0
      %p263 = por %p261, %p262
      %p264 = scmp.ne.s32.totalorder %s253, %s256
      %p265 = scmp.eq.s32.totalorder %s29, 1
      %p266 = por %p264, %p265
      %p267 = scmp.ne.s32.totalorder %s256, %s257
      %p268 = scmp.eq.s32.totalorder %s29, 0
      %p269 = por %p267, %p268
      %p270 = scmp.ne.s32.totalorder %s256, %s257
      %p271 = scmp.eq.s32.totalorder %s30, 1
      %p272 = por %p270, %p271
      %p274 = scmp.ne.s32.totalorder %s257, %s273
      %p275 = scmp.eq.s32.totalorder %s30, 0
      %p276 = por %p274, %p275
      %s277 = ssub.s32 %s24, %s31
      %p278 = scmp.eq.s32.totalorder %s277, 0
      %s280 = sadd.s32 %s279, 1
      %s281 = scalar_select %p278, %s279, %s280
      %p284 = pneg %p278
      %p285 = scmp.eq.s32.totalorder %s24, 1
      %p286 = por %p284, %p285
      %p287 = scmp.ne.s32.totalorder %s279, %s282
      %p288 = scmp.eq.s32.totalorder %s24, 0
      %p289 = por %p287, %p288
      %p290 = scmp.ne.s32.totalorder %s279, %s282
      %p291 = scmp.eq.s32.totalorder %s29, 1
      %p292 = por %p290, %p291
      %p293 = scmp.ne.s32.totalorder %s282, %s283
      %p294 = scmp.eq.s32.totalorder %s29, 0
      %p295 = por %p293, %p294
      %p296 = scmp.ne.s32.totalorder %s282, %s283
      %p297 = scmp.eq.s32.totalorder %s30, 1
      %p298 = por %p296, %p297
      %p300 = scmp.ne.s32.totalorder %s283, %s299
      %p301 = scmp.eq.s32.totalorder %s30, 0
      %p302 = por %p300, %p301
      %s303 = ssub.s32 %s24, %s31
      %p304 = scmp.eq.s32.totalorder %s303, 0
      %s306 = sadd.s32 %s305, 1
      %s307 = scalar_select %p304, %s305, %s306
      %p310 = pneg %p304
      %p311 = scmp.eq.s32.totalorder %s24, 1
      %p312 = por %p310, %p311
      %p313 = scmp.ne.s32.totalorder %s305, %s308
      %p314 = scmp.eq.s32.totalorder %s24, 0
      %p315 = por %p313, %p314
      %p316 = scmp.ne.s32.totalorder %s305, %s308
      %p317 = scmp.eq.s32.totalorder %s29, 1
      %p318 = por %p316, %p317
      %p319 = scmp.ne.s32.totalorder %s308, %s309
      %p320 = scmp.eq.s32.totalorder %s29, 0
      %p321 = por %p319, %p320
      %p322 = scmp.ne.s32.totalorder %s308, %s309
      %p323 = scmp.eq.s32.totalorder %s30, 1
      %p324 = por %p322, %p323
      %p326 = scmp.ne.s32.totalorder %s309, %s325
      %p327 = scmp.eq.s32.totalorder %s30, 0
      %p328 = por %p326, %p327
      %s329 = ssub.s32 %s24, %s31
      %p330 = scmp.eq.s32.totalorder %s329, 0
      %s332 = sadd.s32 %s331, 1
      %s333 = scalar_select %p330, %s331, %s332
      %p336 = pneg %p330
      %p337 = scmp.eq.s32.totalorder %s24, 1
      %p338 = por %p336, %p337
      %p339 = scmp.ne.s32.totalorder %s331, %s334
      %p340 = scmp.eq.s32.totalorder %s24, 0
      %p341 = por %p339, %p340
      %p342 = scmp.ne.s32.totalorder %s331, %s334
      %p343 = scmp.eq.s32.totalorder %s29, 1
      %p344 = por %p342, %p343
      %p345 = scmp.ne.s32.totalorder %s334, %s335
      %p346 = scmp.eq.s32.totalorder %s29, 0
      %p347 = por %p345, %p346
      %p348 = scmp.ne.s32.totalorder %s334, %s335
      %p349 = scmp.eq.s32.totalorder %s30, 1
      %p350 = por %p348, %p349
      %p352 = scmp.ne.s32.totalorder %s335, %s351
      %p353 = scmp.eq.s32.totalorder %s30, 0
      %p354 = por %p352, %p353
      %s355 = ssub.s32 %s24, %s31
      %p356 = scmp.eq.s32.totalorder %s355, 0
      %s358 = sadd.s32 %s357, 1
      %s359 = scalar_select %p356, %s357, %s358
      %p362 = pneg %p356
      %p363 = scmp.eq.s32.totalorder %s24, 1
      %p364 = por %p362, %p363
      %p365 = scmp.ne.s32.totalorder %s357, %s360
      %p366 = scmp.eq.s32.totalorder %s24, 0
      %p367 = por %p365, %p366
      %p368 = scmp.ne.s32.totalorder %s357, %s360
      %p369 = scmp.eq.s32.totalorder %s29, 1
      %p370 = por %p368, %p369
      %p371 = scmp.ne.s32.totalorder %s360, %s361
      %p372 = scmp.eq.s32.totalorder %s29, 0
      %p373 = por %p371, %p372
      %p374 = scmp.ne.s32.totalorder %s360, %s361
      %p375 = scmp.eq.s32.totalorder %s30, 1
      %p376 = por %p374, %p375
      %p378 = scmp.ne.s32.totalorder %s361, %s377
      %p379 = scmp.eq.s32.totalorder %s30, 0
      %p380 = por %p378, %p379
      %s381 = ssub.s32 %s24, %s31
      %p382 = scmp.eq.s32.totalorder %s381, 0
      %s384 = sadd.s32 %s383, 1
      %s385 = scalar_select %p382, %s383, %s384
      %p388 = pneg %p382
      %p389 = scmp.eq.s32.totalorder %s24, 1
      %p390 = por %p388, %p389
      %p391 = scmp.ne.s32.totalorder %s383, %s386
      %p392 = scmp.eq.s32.totalorder %s24, 0
      %p393 = por %p391, %p392
      %p394 = scmp.ne.s32.totalorder %s383, %s386
      %p395 = scmp.eq.s32.totalorder %s29, 1
      %p396 = por %p394, %p395
      %p397 = scmp.ne.s32.totalorder %s386, %s387
      %p398 = scmp.eq.s32.totalorder %s29, 0
      %p399 = por %p397, %p398
      %p400 = scmp.ne.s32.totalorder %s386, %s387
      %p401 = scmp.eq.s32.totalorder %s30, 1
      %p402 = por %p400, %p401
      %p404 = scmp.ne.s32.totalorder %s387, %s403
      %p405 = scmp.eq.s32.totalorder %s30, 0
      %p406 = por %p404, %p405
      %s408 = sadd.s32 %s407, 1
      %p411 = scmp.eq.s32.totalorder %s24, 1
      %p412 = scmp.ne.s32.totalorder %s407, %s409
      %p413 = scmp.eq.s32.totalorder %s24, 0
      %p414 = por %p412, %p413
      %p415 = scmp.ne.s32.totalorder %s407, %s409
      %p416 = scmp.eq.s32.totalorder %s29, 1
      %p417 = por %p415, %p416
      %p418 = scmp.ne.s32.totalorder %s409, %s410
      %p419 = scmp.eq.s32.totalorder %s29, 0
      %p420 = por %p418, %p419
      %p421 = scmp.ne.s32.totalorder %s409, %s410
      %p422 = scmp.eq.s32.totalorder %s30, 1
      %p423 = por %p421, %p422
      %p425 = scmp.ne.s32.totalorder %s410, %s424
      %p426 = scmp.eq.s32.totalorder %s30, 0
      %p427 = por %p425, %p426
      %p428 = scmp.le.s32.totalorder 1, %s24
      %p429 = scmp.lt.s32.totalorder %s24, 3
      %p430 = pnand %p428, %p429
      %p431 = pneg %p430
      // Predicated region
      $region9: #{tpu_custom_call.1} parent=5 // pred_check
        _
      $region10: #{tpu_custom_call.1} parent=5 // pred_check_branch
        %433 = sbr.rel (%p430) target = $region12
      $region11: #{tpu_custom_call.1} parent=5 // pred_region
        %s434 = ssub.s32 %s24, 1
        // Predicated region
        $region13: #{tpu_custom_call.1} parent=11 // pred_check
          %p435 = pneg %p45
        $region14: #{tpu_custom_call.1} parent=11 // pred_check_branch
          %437 = sbr.rel (%p435) target = $region16
        $region15: #{tpu_custom_call.1} parent=11 // pred_region
          %439 = vsyncadd [#allocation4], 0
          %s440 = sshll.u32 %s0, 4
          %s441 = int_to_ptr.hbm [resolvable:$true] %s440
          %s442 = sshll.u32 [#allocation3], 4
          %s443 = int_to_ptr.vmem [resolvable:$true] %s442
          %448 = dma.hbm_to_vmem [thread:$0]  %s441, 256, %s443, [#allocation4], 128, 128, 8
        $region16: #{tpu_custom_call.1} parent=11 // pred_fallthru
          _
        // Predicated region
        $region17: #{tpu_custom_call.1} parent=11 // pred_check
          %p449 = pneg %p66
        $region18: #{tpu_custom_call.1} parent=11 // pred_check_branch
          %451 = sbr.rel (%p449) target = $region20
        $region19: #{tpu_custom_call.1} parent=11 // pred_region
          %453 = vsyncadd [#allocation7], 0
          %s454 = sshll.u32 %s1, 4
          %s455 = int_to_ptr.hbm [resolvable:$true] %s454
          %s456 = sshll.u32 [#allocation6], 4
          %s457 = int_to_ptr.vmem [resolvable:$true] %s456
          %462 = dma.hbm_to_vmem [thread:$0]  %s455, 128, %s457, [#allocation7], 64, 64, 4
        $region20: #{tpu_custom_call.1} parent=11 // pred_fallthru
          _
        // Predicated region
        $region21: #{tpu_custom_call.1} parent=11 // pred_check
          %p463 = pneg %p87
        $region22: #{tpu_custom_call.1} parent=11 // pred_check_branch
          %465 = sbr.rel (%p463) target = $region24
        $region23: #{tpu_custom_call.1} parent=11 // pred_region
          _
        $region24: #{tpu_custom_call.1} parent=11 // pred_fallthru
          _
      $region12: #{tpu_custom_call.1} parent=5 // pred_fallthru
        _
      %p466 = scmp.lt.s32.totalorder %s24, 2
      // Predicated region
      $region25: #{tpu_custom_call.1} parent=5 // pred_check
        %p467 = pneg %p466
      $region26: #{tpu_custom_call.1} parent=5 // pred_check_branch
        %469 = sbr.rel (%p467) target = $region28
      $region27: #{tpu_custom_call.1} parent=5 // pred_region
        // Predicated region
        $region29: #{tpu_custom_call.1} parent=27 // pred_check
          %p470 = pneg %p107
        $region30: #{tpu_custom_call.1} parent=27 // pred_check_branch
          %472 = sbr.rel (%p470) target = $region32
        $region31: #{tpu_custom_call.1} parent=27 // pred_region
          %p473 = scmp.lt.s32.totalorder %s24, 1
          %s474 = scalar_select %p473, %s24, 1
          %s475 = smul.addr %s474, 4
          %s476 = smul.addr %s475, 4
          %s477 = scalar_lea.vmem %s3, %s476
        $region32: #{tpu_custom_call.1} parent=27 // pred_fallthru
          _
        // Predicated region
        $region33: #{tpu_custom_call.1} parent=27 // pred_check
          %p478 = pneg %p133
        $region34: #{tpu_custom_call.1} parent=27 // pred_check_branch
          %480 = sbr.rel (%p478) target = $region36
        $region35: #{tpu_custom_call.1} parent=27 // pred_region
          %p481 = scmp.lt.s32.totalorder %s24, 1
          %s482 = scalar_select %p481, %s24, 1
          %s483 = scalar_lea.vmem %s4, %s482
        $region36: #{tpu_custom_call.1} parent=27 // pred_fallthru
          _
        // Predicated region
        $region37: #{tpu_custom_call.1} parent=27 // pred_check
          %p484 = pneg %p159
        $region38: #{tpu_custom_call.1} parent=27 // pred_check_branch
          %486 = sbr.rel (%p484) target = $region40
        $region39: #{tpu_custom_call.1} parent=27 // pred_region
          %p487 = scmp.lt.s32.totalorder %s24, 1
          %s488 = scalar_select %p487, %s24, 1
          %s489 = smul.addr %s488, 4
          %s490 = smul.addr %s489, 4
          %s491 = scalar_lea.vmem %s5, %s490
        $region40: #{tpu_custom_call.1} parent=27 // pred_fallthru
          _
        // Predicated region
        $region41: #{tpu_custom_call.1} parent=27 // pred_check
          %p492 = pneg %p185
        $region42: #{tpu_custom_call.1} parent=27 // pred_check_branch
          %494 = sbr.rel (%p492) target = $region44
        $region43: #{tpu_custom_call.1} parent=27 // pred_region
          %p495 = scmp.lt.s32.totalorder %s24, 1
          %s496 = scalar_select %p495, %s24, 1
          %s497 = scalar_lea.vmem %s6, %s496
        $region44: #{tpu_custom_call.1} parent=27 // pred_fallthru
          _
        // Predicated region
        $region45: #{tpu_custom_call.1} parent=27 // pred_check
          %p498 = pneg %p211
        $region46: #{tpu_custom_call.1} parent=27 // pred_check_branch
          %500 = sbr.rel (%p498) target = $region48
        $region47: #{tpu_custom_call.1} parent=27 // pred_region
          %s501 = sand.u32 %s24, 1
          %s502 = scalar_lea.sflag [#allocation4], %s501
          %s503 = sand.u32 %s201, 1
          %s504 = scalar_lea.vmem [#allocation8], %s503
          %506 = vsyncadd %s502, 0
          %s507 = scalar_lea.hbm %s7, %s24
          %s509 = sshll.u32 %s507, 4
          %s510 = int_to_ptr.hbm [resolvable:$true] %s509
          %s511 = sshll.u32 %s504, 4
          %s512 = int_to_ptr.vmem [resolvable:$true] %s511
          %514 = dma.hbm_to_vmem [thread:$0]  %s510, 16, %s512, %s502
        $region48: #{tpu_custom_call.1} parent=27 // pred_fallthru
          _
        // Predicated region
        $region49: #{tpu_custom_call.1} parent=27 // pred_check
          %p515 = pneg %p237
        $region50: #{tpu_custom_call.1} parent=27 // pred_check_branch
          %517 = sbr.rel (%p515) target = $region52
        $region51: #{tpu_custom_call.1} parent=27 // pred_region
          %p518 = scmp.lt.s32.totalorder %s24, 1
          %s519 = scalar_select %p518, %s24, 1
          %s520 = scalar_lea.vmem %s8, %s519
        $region52: #{tpu_custom_call.1} parent=27 // pred_fallthru
          _
        // Predicated region
        $region53: #{tpu_custom_call.1} parent=27 // pred_check
          %p521 = pneg %p263
        $region54: #{tpu_custom_call.1} parent=27 // pred_check_branch
          %523 = sbr.rel (%p521) target = $region56
        $region55: #{tpu_custom_call.1} parent=27 // pred_region
          %p524 = scmp.lt.s32.totalorder %s24, 1
          %s525 = scalar_select %p524, %s24, 1
          %s526 = smul.addr %s525, 4
          %s527 = smul.addr %s526, 4
          %s528 = scalar_lea.vmem %s9, %s527
        $region56: #{tpu_custom_call.1} parent=27 // pred_fallthru
          _
        // Predicated region
        $region57: #{tpu_custom_call.1} parent=27 // pred_check
          %p529 = pneg %p289
        $region58: #{tpu_custom_call.1} parent=27 // pred_check_branch
          %531 = sbr.rel (%p529) target = $region60
        $region59: #{tpu_custom_call.1} parent=27 // pred_region
          %p532 = scmp.lt.s32.totalorder %s24, 1
          %s533 = scalar_select %p532, %s24, 1
          %s534 = scalar_lea.vmem %s10, %s533
        $region60: #{tpu_custom_call.1} parent=27 // pred_fallthru
          _
        // Predicated region
        $region61: #{tpu_custom_call.1} parent=27 // pred_check
          %p535 = pneg %p315
        $region62: #{tpu_custom_call.1} parent=27 // pred_check_branch
          %537 = sbr.rel (%p535) target = $region64
        $region63: #{tpu_custom_call.1} parent=27 // pred_region
          %p538 = scmp.lt.s32.totalorder %s24, 1
          %s539 = scalar_select %p538, %s24, 1
          %s540 = smul.addr %s539, 8
          %s541 = smul.addr %s540, 4
          %s542 = scalar_lea.vmem %s11, %s541
        $region64: #{tpu_custom_call.1} parent=27 // pred_fallthru
          _
        // Predicated region
        $region65: #{tpu_custom_call.1} parent=27 // pred_check
          %p543 = pneg %p341
        $region66: #{tpu_custom_call.1} parent=27 // pred_check_branch
          %545 = sbr.rel (%p543) target = $region68
        $region67: #{tpu_custom_call.1} parent=27 // pred_region
          %p546 = scmp.lt.s32.totalorder %s24, 1
          %s547 = scalar_select %p546, %s24, 1
          %s548 = scalar_lea.vmem %s12, %s547
        $region68: #{tpu_custom_call.1} parent=27 // pred_fallthru
          _
        // Predicated region
        $region69: #{tpu_custom_call.1} parent=27 // pred_check
          %p549 = pneg %p367
        $region70: #{tpu_custom_call.1} parent=27 // pred_check_branch
          %551 = sbr.rel (%p549) target = $region72
        $region71: #{tpu_custom_call.1} parent=27 // pred_region
          %s552 = sand.u32 %s24, 1
          %s553 = scalar_lea.sflag [#allocation4], %s552
          %s554 = sand.u32 %s357, 1
          %s555 = scalar_lea.vmem [#allocation9], %s554
          %557 = vsyncadd %s553, 0
          %s558 = scalar_lea.hbm %s13, %s24
          %s560 = sshll.u32 %s558, 4
          %s561 = int_to_ptr.hbm [resolvable:$true] %s560
          %s562 = sshll.u32 %s555, 4
          %s563 = int_to_ptr.vmem [resolvable:$true] %s562
          %565 = dma.hbm_to_vmem [thread:$0]  %s561, 16, %s563, %s553
        $region72: #{tpu_custom_call.1} parent=27 // pred_fallthru
          _
        // Predicated region
        $region73: #{tpu_custom_call.1} parent=27 // pred_check
          %p566 = pneg %p393
        $region74: #{tpu_custom_call.1} parent=27 // pred_check_branch
          %568 = sbr.rel (%p566) target = $region76
        $region75: #{tpu_custom_call.1} parent=27 // pred_region
          %p569 = scmp.lt.s32.totalorder %s24, 1
          %s570 = scalar_select %p569, %s24, 1
          %s571 = scalar_lea.vmem %s14, %s570
        $region76: #{tpu_custom_call.1} parent=27 // pred_fallthru
          _
      $region28: #{tpu_custom_call.1} parent=5 // pred_fallthru
        _
      %p572 = scmp.le.s32.totalorder 1, %s24
      %p573 = scmp.lt.s32.totalorder %s24, 3
      %p574 = pnand %p572, %p573
      %p575 = pneg %p574
      // Predicated region
      $region77: #{tpu_custom_call.1} parent=5 // pred_check
        _
      $region78: #{tpu_custom_call.1} parent=5 // pred_check_branch
        %577 = sbr.rel (%p574) target = $region80
      $region79: #{tpu_custom_call.1} parent=5 // pred_region
        %s578 = ssub.s32 %s24, 1
        // Predicated region
        $region81: #{tpu_custom_call.1} parent=79 // pred_check
          %p579 = pneg %p45
        $region82: #{tpu_custom_call.1} parent=79 // pred_check_branch
          %581 = sbr.rel (%p579) target = $region84
        $region83: #{tpu_custom_call.1} parent=79 // pred_region
          %583 = dma.done [#allocation4], 256
        $region84: #{tpu_custom_call.1} parent=79 // pred_fallthru
          _
        // Predicated region
        $region85: #{tpu_custom_call.1} parent=79 // pred_check
          %p584 = pneg %p66
        $region86: #{tpu_custom_call.1} parent=79 // pred_check_branch
          %586 = sbr.rel (%p584) target = $region88
        $region87: #{tpu_custom_call.1} parent=79 // pred_region
          %588 = dma.done [#allocation7], 128
        $region88: #{tpu_custom_call.1} parent=79 // pred_fallthru
          _
        %s589 = sand.u32 %s29, 1
        %s590 = scalar_lea.sflag [#allocation4], %s589
        %s591 = sand.u32 %s204, 1
        %s592 = scalar_lea.vmem [#allocation8], %s591
        // Predicated region
        $region89: #{tpu_custom_call.1} parent=79 // pred_check
          %p593 = pneg %p217
        $region90: #{tpu_custom_call.1} parent=79 // pred_check_branch
          %595 = sbr.rel (%p593) target = $region92
        $region91: #{tpu_custom_call.1} parent=79 // pred_region
          %597 = dma.done %s590, 16
        $region92: #{tpu_custom_call.1} parent=79 // pred_fallthru
          _
        %s598 = sand.u32 %s29, 1
        %s599 = scalar_lea.sflag [#allocation4], %s598
        %s600 = sand.u32 %s360, 1
        %s601 = scalar_lea.vmem [#allocation9], %s600
        // Predicated region
        $region93: #{tpu_custom_call.1} parent=79 // pred_check
          %p602 = pneg %p373
        $region94: #{tpu_custom_call.1} parent=79 // pred_check_branch
          %604 = sbr.rel (%p602) target = $region96
        $region95: #{tpu_custom_call.1} parent=79 // pred_region
          %606 = dma.done %s599, 16
        $region96: #{tpu_custom_call.1} parent=79 // pred_fallthru
          _
        %p607 = pneg %p45
        %p608 = pneg %p42
        %p609 = pneg %p66
        %p610 = pneg %p63
        %p611 = pneg %p87
        %p612 = pneg %p84
        %p613 = scmp.lt.s32.totalorder %s29, 1
        %s614 = scalar_select %p613, %s29, 1
        %s615 = smul.addr %s614, 4
        %s616 = smul.addr %s615, 4
        %s617 = scalar_lea.vmem %s3, %s616
        %p618 = pneg %p113
        %p619 = pneg %p110
        %p620 = scmp.lt.s32.totalorder %s29, 1
        %s621 = scalar_select %p620, %s29, 1
        %s622 = scalar_lea.vmem %s4, %s621
        %p623 = pneg %p139
        %p624 = pneg %p136
        %p625 = scmp.lt.s32.totalorder %s29, 1
        %s626 = scalar_select %p625, %s29, 1
        %s627 = smul.addr %s626, 4
        %s628 = smul.addr %s627, 4
        %s629 = scalar_lea.vmem %s5, %s628
        %p630 = pneg %p165
        %p631 = pneg %p162
        %p632 = scmp.lt.s32.totalorder %s29, 1
        %s633 = scalar_select %p632, %s29, 1
        %s634 = scalar_lea.vmem %s6, %s633
        %p635 = pneg %p191
        %p636 = pneg %p188
        %s637 = sand.u32 %s29, 1
        %s638 = scalar_lea.sflag [#allocation4], %s637
        %s639 = sand.u32 %s204, 1
        %s640 = scalar_lea.vmem [#allocation8], %s639
        %p641 = pneg %p217
        %p642 = pneg %p214
        %p643 = scmp.lt.s32.totalorder %s29, 1
        %s644 = scalar_select %p643, %s29, 1
        %s645 = scalar_lea.vmem %s8, %s644
        %p646 = pneg %p243
        %p647 = pneg %p240
        %p648 = scmp.lt.s32.totalorder %s29, 1
        %s649 = scalar_select %p648, %s29, 1
        %s650 = smul.addr %s649, 4
        %s651 = smul.addr %s650, 4
        %s652 = scalar_lea.vmem %s9, %s651
        %p653 = pneg %p269
        %p654 = pneg %p266
        %p655 = scmp.lt.s32.totalorder %s29, 1
        %s656 = scalar_select %p655, %s29, 1
        %s657 = scalar_lea.vmem %s10, %s656
        %p658 = pneg %p295
        %p659 = pneg %p292
        %p660 = scmp.lt.s32.totalorder %s29, 1
        %s661 = scalar_select %p660, %s29, 1
        %s662 = smul.addr %s661, 8
        %s663 = smul.addr %s662, 4
        %s664 = scalar_lea.vmem %s11, %s663
        %p665 = pneg %p321
        %p666 = pneg %p318
        %p667 = scmp.lt.s32.totalorder %s29, 1
        %s668 = scalar_select %p667, %s29, 1
        %s669 = scalar_lea.vmem %s12, %s668
        %p670 = pneg %p347
        %p671 = pneg %p344
        %s672 = sand.u32 %s29, 1
        %s673 = scalar_lea.sflag [#allocation4], %s672
        %s674 = sand.u32 %s360, 1
        %s675 = scalar_lea.vmem [#allocation9], %s674
        %p676 = pneg %p373
        %p677 = pneg %p370
        %p678 = scmp.lt.s32.totalorder %s29, 1
        %s679 = scalar_select %p678, %s29, 1
        %s680 = scalar_lea.vmem %s14, %s679
        %p681 = pneg %p399
        %p682 = pneg %p396
        %p683 = pneg %p420
        %p684 = pneg %p417
        %p685 = scmp.lt.s32.totalorder %s29, 1
        %s686 = scalar_select %p685, %s29, 1
        %s687 = smul.addr %s686, 4
        %s688 = smul.addr %s687, 4
        %s689 = scalar_lea.vmem %s3, %s688
        %p690 = scmp.lt.s32.totalorder %s29, 1
        %s691 = scalar_select %p690, %s29, 1
        %s692 = scalar_lea.vmem %s4, %s691
        %p693 = scmp.lt.s32.totalorder %s29, 1
        %s694 = scalar_select %p693, %s29, 1
        %s695 = smul.addr %s694, 4
        %s696 = smul.addr %s695, 4
        %s697 = scalar_lea.vmem %s5, %s696
        %p698 = scmp.lt.s32.totalorder %s29, 1
        %s699 = scalar_select %p698, %s29, 1
        %s700 = scalar_lea.vmem %s6, %s699
        %p701 = scmp.lt.s32.totalorder %s29, 1
        %s702 = scalar_select %p701, %s29, 1
        %s703 = scalar_lea.vmem %s8, %s702
        %p704 = scmp.lt.s32.totalorder %s29, 1
        %s705 = scalar_select %p704, %s29, 1
        %s706 = smul.addr %s705, 4
        %s707 = smul.addr %s706, 4
        %s708 = scalar_lea.vmem %s9, %s707
        %p709 = scmp.lt.s32.totalorder %s29, 1
        %s710 = scalar_select %p709, %s29, 1
        %s711 = scalar_lea.vmem %s10, %s710
        %p712 = scmp.lt.s32.totalorder %s29, 1
        %s713 = scalar_select %p712, %s29, 1
        %s714 = smul.addr %s713, 8
        %s715 = smul.addr %s714, 4
        %s716 = scalar_lea.vmem %s11, %s715
        %p717 = scmp.lt.s32.totalorder %s29, 1
        %s718 = scalar_select %p717, %s29, 1
        %s719 = scalar_lea.vmem %s12, %s718
        %p720 = scmp.lt.s32.totalorder %s29, 1
        %s721 = scalar_select %p720, %s29, 1
        %s722 = scalar_lea.vmem %s14, %s721
        %p724 = scmp.eq.s32.totalorder %s29, 0
        // Predicated region
        $region97: #{tpu_custom_call.1} parent=79 // pred_check
          %p725 = pneg %p724
        $region98: #{tpu_custom_call.1} parent=79 // pred_check_branch
          %727 = sbr.rel (%p725) target = $region100
        $region99: #{tpu_custom_call.1} parent=79 // pred_region
          %v728 = vld [vmem:[#allocation3] sm:$0xff]
          %v729 = vld [vmem:[#allocation3 + $0x8] sm:$0xff]
          %v730 = vpack.c.bf16 %v729, %v728
          %v731 = vld [vmem:[#allocation6] sm:$0xf]
          %v732 = vld [vmem:[#allocation6 + $0x4] sm:$0xf]
          %v733 = vld [vmem:[%s2] sm:$0x1]
          %v735 = vperm.slane %v733, 0
          %v739 = vunpack.c.l.b16 %v731
          %v740 = vunpack.c.l.b16 %v732
          %v741 = vpack.c.b16 %v740, %v739
          %vm743 = vcmask 130048
          %v745 = vsel %vm743, %v730, 0
          %747 = vmatpush.bf16.msra.mxu0 0
          %748 = vmatpush.bf16.msra.mxu0 0
          %749 = vmatpush.bf16.msra.mxu0 0
          %750 = vmatpush.bf16.msra.mxu0 0
          %751 = vmatpush.bf16.msra.mxu0 0
          %752 = vmatpush.bf16.msra.mxu0 0
          %753 = vmatpush.bf16.msra.mxu0 0
          %754 = vmatpush.bf16.msra.mxu0 %v741
          %755 = vmatmul.bf16.gmra.mxu0 %v745
          %v756 = vpop.f32.mrf.mxu0
          %v757 = vadd.f32 %v735, %v756
          %v758 = vpop.f32.mrf.mxu0
          %v759 = vadd.f32 %v735, %v758
          %760 = vdwg.mxu0
          %vm761 = vcmask 261120
          %762 = vst.msk [vmem:[#allocation2] sm:$0xff] %vm761, %v757
          %763 = vst.msk [vmem:[#allocation2 + $0x8] sm:$0xff] %vm761, %v759
        $region100: #{tpu_custom_call.1} parent=79 // pred_fallthru
          _
        %v764 = vld [vmem:[#allocation2] sm:$0xff]
        %v765 = vld [vmem:[#allocation2 + $0x8] sm:$0xff]
        %v766 = vpack.c.bf16 %v765, %v764
        %v767 = vld [vmem:[%s689] sm:$0xf]
        %v768 = vld [vmem:[%s689 + $0x4] sm:$0xf]
        %v769 = vld [vmem:[%s689 + $0x8] sm:$0xf]
        %v770 = vld [vmem:[%s689 + $0xc] sm:$0xf]
        %v771 = vld [vmem:[%s692] sm:$0x1]
        %v773 = vperm.slane %v771, 0
        %v779 = vunpack.c.l.b16 %v767
        %v780 = vunpack.c.l.b16 %v768
        %v781 = vunpack.c.l.b16 %v769
        %v782 = vunpack.c.l.b16 %v770
        %v783 = vpack.c.b16 %v780, %v779
        %v784 = vpack.c.b16 %v782, %v781
        %vm787 = vcmask 261120
        %v789 = vsel %vm787, %v766, 0
        %791 = vmatpush.bf16.msra.mxu0 0
        %792 = vmatpush.bf16.msra.mxu0 0
        %793 = vmatpush.bf16.msra.mxu0 0
        %794 = vmatpush.bf16.msra.mxu0 0
        %795 = vmatpush.bf16.msra.mxu0 0
        %796 = vmatpush.bf16.msra.mxu0 0
        %797 = vmatpush.bf16.msra.mxu0 %v784
        %798 = vmatpush.bf16.msra.mxu0 %v783
        %799 = vmatmul.bf16.gmra.mxu0 %v789
        %v800 = vpop.f32.mrf.mxu0
        %v801 = vadd.f32 %v773, %v800
        %v802 = vpop.f32.mrf.mxu0
        %v803 = vadd.f32 %v773, %v802
        %804 = vdwg.mxu0
        %v805 = vmul.f32 %v801, 0.35355338
        %v806 = vmul.f32 %v803, 0.35355338
        %v807 = vpack.c.bf16 %v805, %v805
        %v808 = vpack.c.bf16 %v806, %v806
        %v809 = vpack.c.bf16 %v801, %v801
        %v810 = vpack.c.bf16 %v803, %v803
        %812 = vrot.lane.b32.xlu0 %v807, 120
        %v813 = vpop.permute.xlu0 %812
        %814 = vrot.lane.b32.xlu0 %v807, 112
        %v815 = vpop.permute.xlu0 %814
        %816 = vrot.lane.b32.xlu0 %v807, 104
        %v817 = vpop.permute.xlu0 %816
        %819 = vrot.lane.b32.xlu0 %v809, 120
        %v820 = vpop.permute.xlu0 %819
        %821 = vrot.lane.b32.xlu0 %v809, 112
        %v822 = vpop.permute.xlu0 %821
        %823 = vrot.lane.b32.xlu0 %v809, 104
        %v824 = vpop.permute.xlu0 %823
        %v825 = vunpack.c.l.b16 %v809
        %v826 = vpack.c.b16 %v825, %v825
        %827 = vrot.lane.b32.xlu0 %v826, 96
        %v828 = vpop.permute.xlu0 %827
        %vm829 = vcmask 64512
        %v831 = vsel %vm829, %v807, 0
        %v834 = vsel %vm829, %v828, 0
        %836 = vmatpush.bf16.xpose.msra.mxu0 0
        %837 = vmatpush.bf16.xpose.msra.mxu0 0
        %838 = vmatpush.bf16.xpose.msra.mxu0 0
        %839 = vmatpush.bf16.xpose.msra.mxu0 0
        %840 = vmatpush.bf16.xpose.msra.mxu0 0
        %841 = vmatpush.bf16.xpose.msra.mxu0 0
        %842 = vmatpush.bf16.xpose.msra.mxu0 0
        %843 = vmatpush.bf16.xpose.msra.mxu0 %v834
        %844 = vmatmul.bf16.gmra.mxu0 %v831
        %v845 = vpop.f32.mrf.mxu0
        %v846 = vadd.f32 0.0, %v845
        %v847 = vpop.f32.mrf.mxu0
        %848 = vdwg.mxu0
        %v849 = vunpack.c.l.b16 %v820
        %v850 = vpack.c.b16 %v849, %v849
        %851 = vrot.lane.b32.xlu0 %v850, 96
        %v852 = vpop.permute.xlu0 %851
        %v854 = vsel %vm829, %v813, 0
        %v857 = vsel %vm829, %v852, 0
        %859 = vmatpush.bf16.xpose.msra.mxu0 0
        %860 = vmatpush.bf16.xpose.msra.mxu0 0
        %861 = vmatpush.bf16.xpose.msra.mxu0 0
        %862 = vmatpush.bf16.xpose.msra.mxu0 0
        %863 = vmatpush.bf16.xpose.msra.mxu0 0
        %864 = vmatpush.bf16.xpose.msra.mxu0 0
        %865 = vmatpush.bf16.xpose.msra.mxu0 0
        %866 = vmatpush.bf16.xpose.msra.mxu0 %v857
        %867 = vmatmul.bf16.gmra.mxu0 %v854
        %v868 = vpop.f32.mrf.mxu0
        %v869 = vadd.f32 0.0, %v868
        %v870 = vpop.f32.mrf.mxu0
        %871 = vdwg.mxu0
        %v872 = vunpack.c.l.b16 %v822
        %v873 = vpack.c.b16 %v872, %v872
        %874 = vrot.lane.b32.xlu0 %v873, 96
        %v875 = vpop.permute.xlu0 %874
        %v877 = vsel %vm829, %v815, 0
        %v880 = vsel %vm829, %v875, 0
        %882 = vmatpush.bf16.xpose.msra.mxu0 0
        %883 = vmatpush.bf16.xpose.msra.mxu0 0
        %884 = vmatpush.bf16.xpose.msra.mxu0 0
        %885 = vmatpush.bf16.xpose.msra.mxu0 0
        %886 = vmatpush.bf16.xpose.msra.mxu0 0
        %887 = vmatpush.bf16.xpose.msra.mxu0 0
        %888 = vmatpush.bf16.xpose.msra.mxu0 0
        %889 = vmatpush.bf16.xpose.msra.mxu0 %v880
        %890 = vmatmul.bf16.gmra.mxu0 %v877
        %v891 = vpop.f32.mrf.mxu0
        %v892 = vadd.f32 0.0, %v891
        %v893 = vpop.f32.mrf.mxu0
        %894 = vdwg.mxu0
        %v895 = vunpack.c.l.b16 %v824
        %v896 = vpack.c.b16 %v895, %v895
        %897 = vrot.lane.b32.xlu0 %v896, 96
        %v898 = vpop.permute.xlu0 %897
        %v900 = vsel %vm829, %v817, 0
        %v903 = vsel %vm829, %v898, 0
        %905 = vmatpush.bf16.xpose.msra.mxu0 0
        %906 = vmatpush.bf16.xpose.msra.mxu0 0
        %907 = vmatpush.bf16.xpose.msra.mxu0 0
        %908 = vmatpush.bf16.xpose.msra.mxu0 0
        %909 = vmatpush.bf16.xpose.msra.mxu0 0
        %910 = vmatpush.bf16.xpose.msra.mxu0 0
        %911 = vmatpush.bf16.xpose.msra.mxu0 0
        %912 = vmatpush.bf16.xpose.msra.mxu0 %v903
        %913 = vmatmul.bf16.gmra.mxu0 %v900
        %v914 = vpop.f32.mrf.mxu0
        %v915 = vadd.f32 0.0, %v914
        %v916 = vpop.f32.mrf.mxu0
        %917 = vdwg.mxu0
        %v918 = vsel %vm829, %v846, -inf
        %919 = vmax.xlane.f32.xlu0 %v918
        %v920 = vpop.xlane.xlu0 %919
        %v921 = vsel %vm829, %v869, -inf
        %922 = vmax.xlane.f32.xlu0 %v921
        %v923 = vpop.xlane.xlu0 %922
        %v924 = vsel %vm829, %v892, -inf
        %925 = vmax.xlane.f32.xlu0 %v924
        %v926 = vpop.xlane.xlu0 %925
        %v927 = vsel %vm829, %v915, -inf
        %928 = vmax.xlane.f32.xlu0 %v927
        %v929 = vpop.xlane.xlu0 %928
        %v930 = vsub.f32 %v846, %v920
        %v931 = vsub.f32 %v869, %v923
        %v932 = vsub.f32 %v892, %v926
        %v933 = vsub.f32 %v915, %v929
        %v934 = vmul.f32 %v930, 1.442695
        %v935 = vpow.pop %v934
        %v936 = vmul.f32 %v931, 1.442695
        %v937 = vpow.pop %v936
        %v938 = vmul.f32 %v932, 1.442695
        %v939 = vpow.pop %v938
        %v940 = vmul.f32 %v933, 1.442695
        %v941 = vpow.pop %v940
        %v942 = vsel %vm829, %v935, 0.0
        %943 = vadd.xlane.f32.xlu0 %v942
        %v944 = vpop.xlane.xlu0 %943
        %v945 = vsel %vm829, %v937, 0.0
        %946 = vadd.xlane.f32.xlu0 %v945
        %v947 = vpop.xlane.xlu0 %946
        %v948 = vsel %vm829, %v939, 0.0
        %949 = vadd.xlane.f32.xlu0 %v948
        %v950 = vpop.xlane.xlu0 %949
        %v951 = vsel %vm829, %v941, 0.0
        %952 = vadd.xlane.f32.xlu0 %v951
        %v953 = vpop.xlane.xlu0 %952
        %v954 = vrcp.pop %v944
        %v955 = vrcp.pop %v947
        %v956 = vrcp.pop %v950
        %v957 = vrcp.pop %v953
        %v958 = vmul.f32 %v935, %v954
        %v959 = vmul.f32 %v937, %v955
        %v960 = vmul.f32 %v939, %v956
        %v961 = vmul.f32 %v941, %v957
        %v962 = vpack.c.bf16 %v958, %v958
        %v963 = vpack.c.bf16 %v959, %v959
        %v964 = vpack.c.bf16 %v960, %v960
        %v965 = vpack.c.bf16 %v961, %v961
        %966 = vrot.lane.b32.xlu0 %v826, 64
        %v967 = vpop.permute.xlu0 %966
        %v969 = vsel %vm829, %v962, 0
        %vm971 = vcmask 1043456
        %v973 = vsel %vm971, %v967, 0
        %975 = vmatpush.bf16.msra.mxu0 0
        %976 = vmatpush.bf16.msra.mxu0 0
        %977 = vmatpush.bf16.msra.mxu0 0
        %978 = vmatpush.bf16.msra.mxu0 0
        %979 = vmatpush.bf16.msra.mxu0 0
        %980 = vmatpush.bf16.msra.mxu0 0
        %981 = vmatpush.bf16.msra.mxu0 0
        %982 = vmatpush.bf16.msra.mxu0 %v973
        %983 = vmatmul.bf16.gmra.mxu0 %v969
        %v984 = vpop.f32.mrf.mxu0
        %v985 = vadd.f32 0.0, %v984
        %v986 = vpop.f32.mrf.mxu0
        %987 = vdwg.mxu0
        %988 = vrot.lane.b32.xlu0 %v850, 64
        %v989 = vpop.permute.xlu0 %988
        %v991 = vsel %vm829, %v963, 0
        %v994 = vsel %vm971, %v989, 0
        %996 = vmatpush.bf16.msra.mxu0 0
        %997 = vmatpush.bf16.msra.mxu0 0
        %998 = vmatpush.bf16.msra.mxu0 0
        %999 = vmatpush.bf16.msra.mxu0 0
        %1000 = vmatpush.bf16.msra.mxu0 0
        %1001 = vmatpush.bf16.msra.mxu0 0
        %1002 = vmatpush.bf16.msra.mxu0 0
        %1003 = vmatpush.bf16.msra.mxu0 %v994
        %1004 = vmatmul.bf16.gmra.mxu0 %v991
        %v1005 = vpop.f32.mrf.mxu0
        %v1006 = vadd.f32 0.0, %v1005
        %v1007 = vpop.f32.mrf.mxu0
        %1008 = vdwg.mxu0
        %1009 = vrot.lane.b32.xlu0 %v873, 64
        %v1010 = vpop.permute.xlu0 %1009
        %v1012 = vsel %vm829, %v964, 0
        %v1015 = vsel %vm971, %v1010, 0
        %1017 = vmatpush.bf16.msra.mxu0 0
        %1018 = vmatpush.bf16.msra.mxu0 0
        %1019 = vmatpush.bf16.msra.mxu0 0
        %1020 = vmatpush.bf16.msra.mxu0 0
        %1021 = vmatpush.bf16.msra.mxu0 0
        %1022 = vmatpush.bf16.msra.mxu0 0
        %1023 = vmatpush.bf16.msra.mxu0 0
        %1024 = vmatpush.bf16.msra.mxu0 %v1015
        %1025 = vmatmul.bf16.gmra.mxu0 %v1012
        %v1026 = vpop.f32.mrf.mxu0
        %v1027 = vadd.f32 0.0, %v1026
        %v1028 = vpop.f32.mrf.mxu0
        %1029 = vdwg.mxu0
        %1030 = vrot.lane.b32.xlu0 %v896, 64
        %v1031 = vpop.permute.xlu0 %1030
        %v1033 = vsel %vm829, %v965, 0
        %v1036 = vsel %vm971, %v1031, 0
        %1038 = vmatpush.bf16.msra.mxu0 0
        %1039 = vmatpush.bf16.msra.mxu0 0
        %1040 = vmatpush.bf16.msra.mxu0 0
        %1041 = vmatpush.bf16.msra.mxu0 0
        %1042 = vmatpush.bf16.msra.mxu0 0
        %1043 = vmatpush.bf16.msra.mxu0 0
        %1044 = vmatpush.bf16.msra.mxu0 0
        %1045 = vmatpush.bf16.msra.mxu0 %v1036
        %1046 = vmatmul.bf16.gmra.mxu0 %v1033
        %v1047 = vpop.f32.mrf.mxu0
        %v1048 = vadd.f32 0.0, %v1047
        %v1049 = vpop.f32.mrf.mxu0
        %1050 = vdwg.mxu0
        %1052 = vrot.lane.b32.xlu0 %v1006, 8
        %v1053 = vpop.permute.xlu0 %1052
        %1056 = vrot.lane.b32.xlu0 %v1027, 16
        %v1057 = vpop.permute.xlu0 %1056
        %1060 = vrot.lane.b32.xlu0 %v1048, 24
        %v1061 = vpop.permute.xlu0 %1060
        %v1063 = vsel %vm829, %v985, %v1053
        %vm1064 = vcmask 130048
        %v1065 = vsel %vm1064, %v1063, %v1057
        %vm1066 = vcmask 195584
        %v1067 = vsel %vm1066, %v1065, %v1061
        %1069 = vrot.lane.b32.xlu0 %v808, 120
        %v1070 = vpop.permute.xlu0 %1069
        %1071 = vrot.lane.b32.xlu0 %v808, 112
        %v1072 = vpop.permute.xlu0 %1071
        %1073 = vrot.lane.b32.xlu0 %v808, 104
        %v1074 = vpop.permute.xlu0 %1073
        %1076 = vrot.lane.b32.xlu0 %v810, 120
        %v1077 = vpop.permute.xlu0 %1076
        %1078 = vrot.lane.b32.xlu0 %v810, 112
        %v1079 = vpop.permute.xlu0 %1078
        %1080 = vrot.lane.b32.xlu0 %v810, 104
        %v1081 = vpop.permute.xlu0 %1080
        %v1082 = vunpack.c.l.b16 %v810
        %v1083 = vpack.c.b16 %v1082, %v1082
        %1084 = vrot.lane.b32.xlu0 %v1083, 96
        %v1085 = vpop.permute.xlu0 %1084
        %v1087 = vsel %vm829, %v808, 0
        %v1090 = vsel %vm829, %v1085, 0
        %1092 = vmatpush.bf16.xpose.msra.mxu0 0
        %1093 = vmatpush.bf16.xpose.msra.mxu0 0
        %1094 = vmatpush.bf16.xpose.msra.mxu0 0
        %1095 = vmatpush.bf16.xpose.msra.mxu0 0
        %1096 = vmatpush.bf16.xpose.msra.mxu0 0
        %1097 = vmatpush.bf16.xpose.msra.mxu0 0
        %1098 = vmatpush.bf16.xpose.msra.mxu0 0
        %1099 = vmatpush.bf16.xpose.msra.mxu0 %v1090
        %1100 = vmatmul.bf16.gmra.mxu0 %v1087
        %v1101 = vpop.f32.mrf.mxu0
        %v1102 = vadd.f32 0.0, %v1101
        %v1103 = vpop.f32.mrf.mxu0
        %1104 = vdwg.mxu0
        %v1105 = vunpack.c.l.b16 %v1077
        %v1106 = vpack.c.b16 %v1105, %v1105
        %1107 = vrot.lane.b32.xlu0 %v1106, 96
        %v1108 = vpop.permute.xlu0 %1107
        %v1110 = vsel %vm829, %v1070, 0
        %v1113 = vsel %vm829, %v1108, 0
        %1115 = vmatpush.bf16.xpose.msra.mxu0 0
        %1116 = vmatpush.bf16.xpose.msra.mxu0 0
        %1117 = vmatpush.bf16.xpose.msra.mxu0 0
        %1118 = vmatpush.bf16.xpose.msra.mxu0 0
        %1119 = vmatpush.bf16.xpose.msra.mxu0 0
        %1120 = vmatpush.bf16.xpose.msra.mxu0 0
        %1121 = vmatpush.bf16.xpose.msra.mxu0 0
        %1122 = vmatpush.bf16.xpose.msra.mxu0 %v1113
        %1123 = vmatmul.bf16.gmra.mxu0 %v1110
        %v1124 = vpop.f32.mrf.mxu0
        %v1125 = vadd.f32 0.0, %v1124
        %v1126 = vpop.f32.mrf.mxu0
        %1127 = vdwg.mxu0
        %v1128 = vunpack.c.l.b16 %v1079
        %v1129 = vpack.c.b16 %v1128, %v1128
        %1130 = vrot.lane.b32.xlu0 %v1129, 96
        %v1131 = vpop.permute.xlu0 %1130
        %v1133 = vsel %vm829, %v1072, 0
        %v1136 = vsel %vm829, %v1131, 0
        %1138 = vmatpush.bf16.xpose.msra.mxu0 0
        %1139 = vmatpush.bf16.xpose.msra.mxu0 0
        %1140 = vmatpush.bf16.xpose.msra.mxu0 0
        %1141 = vmatpush.bf16.xpose.msra.mxu0 0
        %1142 = vmatpush.bf16.xpose.msra.mxu0 0
        %1143 = vmatpush.bf16.xpose.msra.mxu0 0
        %1144 = vmatpush.bf16.xpose.msra.mxu0 0
        %1145 = vmatpush.bf16.xpose.msra.mxu0 %v1136
        %1146 = vmatmul.bf16.gmra.mxu0 %v1133
        %v1147 = vpop.f32.mrf.mxu0
        %v1148 = vadd.f32 0.0, %v1147
        %v1149 = vpop.f32.mrf.mxu0
        %1150 = vdwg.mxu0
        %v1151 = vunpack.c.l.b16 %v1081
        %v1152 = vpack.c.b16 %v1151, %v1151
        %1153 = vrot.lane.b32.xlu0 %v1152, 96
        %v1154 = vpop.permute.xlu0 %1153
        %v1156 = vsel %vm829, %v1074, 0
        %v1159 = vsel %vm829, %v1154, 0
        %1161 = vmatpush.bf16.xpose.msra.mxu0 0
        %1162 = vmatpush.bf16.xpose.msra.mxu0 0
        %1163 = vmatpush.bf16.xpose.msra.mxu0 0
        %1164 = vmatpush.bf16.xpose.msra.mxu0 0
        %1165 = vmatpush.bf16.xpose.msra.mxu0 0
        %1166 = vmatpush.bf16.xpose.msra.mxu0 0
        %1167 = vmatpush.bf16.xpose.msra.mxu0 0
        %1168 = vmatpush.bf16.xpose.msra.mxu0 %v1159
        %1169 = vmatmul.bf16.gmra.mxu0 %v1156
        %v1170 = vpop.f32.mrf.mxu0
        %v1171 = vadd.f32 0.0, %v1170
        %v1172 = vpop.f32.mrf.mxu0
        %1173 = vdwg.mxu0
        %v1174 = vsel %vm829, %v1102, -inf
        %1175 = vmax.xlane.f32.xlu0 %v1174
        %v1176 = vpop.xlane.xlu0 %1175
        %v1177 = vsel %vm829, %v1125, -inf
        %1178 = vmax.xlane.f32.xlu0 %v1177
        %v1179 = vpop.xlane.xlu0 %1178
        %v1180 = vsel %vm829, %v1148, -inf
        %1181 = vmax.xlane.f32.xlu0 %v1180
        %v1182 = vpop.xlane.xlu0 %1181
        %v1183 = vsel %vm829, %v1171, -inf
        %1184 = vmax.xlane.f32.xlu0 %v1183
        %v1185 = vpop.xlane.xlu0 %1184
        %v1186 = vsub.f32 %v1102, %v1176
        %v1187 = vsub.f32 %v1125, %v1179
        %v1188 = vsub.f32 %v1148, %v1182
        %v1189 = vsub.f32 %v1171, %v1185
        %v1190 = vmul.f32 %v1186, 1.442695
        %v1191 = vpow.pop %v1190
        %v1192 = vmul.f32 %v1187, 1.442695
        %v1193 = vpow.pop %v1192
        %v1194 = vmul.f32 %v1188, 1.442695
        %v1195 = vpow.pop %v1194
        %v1196 = vmul.f32 %v1189, 1.442695
        %v1197 = vpow.pop %v1196
        %v1198 = vsel %vm829, %v1191, 0.0
        %1199 = vadd.xlane.f32.xlu0 %v1198
        %v1200 = vpop.xlane.xlu0 %1199
        %v1201 = vsel %vm829, %v1193, 0.0
        %1202 = vadd.xlane.f32.xlu0 %v1201
        %v1203 = vpop.xlane.xlu0 %1202
        %v1204 = vsel %vm829, %v1195, 0.0
        %1205 = vadd.xlane.f32.xlu0 %v1204
        %v1206 = vpop.xlane.xlu0 %1205
        %v1207 = vsel %vm829, %v1197, 0.0
        %1208 = vadd.xlane.f32.xlu0 %v1207
        %v1209 = vpop.xlane.xlu0 %1208
        %v1210 = vrcp.pop %v1200
        %v1211 = vrcp.pop %v1203
        %v1212 = vrcp.pop %v1206
        %v1213 = vrcp.pop %v1209
        %v1214 = vmul.f32 %v1191, %v1210
        %v1215 = vmul.f32 %v1193, %v1211
        %v1216 = vmul.f32 %v1195, %v1212
        %v1217 = vmul.f32 %v1197, %v1213
        %v1218 = vpack.c.bf16 %v1214, %v1214
        %v1219 = vpack.c.bf16 %v1215, %v1215
        %v1220 = vpack.c.bf16 %v1216, %v1216
        %v1221 = vpack.c.bf16 %v1217, %v1217
        %1222 = vrot.lane.b32.xlu0 %v1083, 64
        %v1223 = vpop.permute.xlu0 %1222
        %v1225 = vsel %vm829, %v1218, 0
        %v1228 = vsel %vm971, %v1223, 0
        %1230 = vmatpush.bf16.msra.mxu0 0
        %1231 = vmatpush.bf16.msra.mxu0 0
        %1232 = vmatpush.bf16.msra.mxu0 0
        %1233 = vmatpush.bf16.msra.mxu0 0
        %1234 = vmatpush.bf16.msra.mxu0 0
        %1235 = vmatpush.bf16.msra.mxu0 0
        %1236 = vmatpush.bf16.msra.mxu0 0
        %1237 = vmatpush.bf16.msra.mxu0 %v1228
        %1238 = vmatmul.bf16.gmra.mxu0 %v1225
        %v1239 = vpop.f32.mrf.mxu0
        %v1240 = vadd.f32 0.0, %v1239
        %v1241 = vpop.f32.mrf.mxu0
        %1242 = vdwg.mxu0
        %1243 = vrot.lane.b32.xlu0 %v1106, 64
        %v1244 = vpop.permute.xlu0 %1243
        %v1246 = vsel %vm829, %v1219, 0
        %v1249 = vsel %vm971, %v1244, 0
        %1251 = vmatpush.bf16.msra.mxu0 0
        %1252 = vmatpush.bf16.msra.mxu0 0
        %1253 = vmatpush.bf16.msra.mxu0 0
        %1254 = vmatpush.bf16.msra.mxu0 0
        %1255 = vmatpush.bf16.msra.mxu0 0
        %1256 = vmatpush.bf16.msra.mxu0 0
        %1257 = vmatpush.bf16.msra.mxu0 0
        %1258 = vmatpush.bf16.msra.mxu0 %v1249
        %1259 = vmatmul.bf16.gmra.mxu0 %v1246
        %v1260 = vpop.f32.mrf.mxu0
        %v1261 = vadd.f32 0.0, %v1260
        %v1262 = vpop.f32.mrf.mxu0
        %1263 = vdwg.mxu0
        %1264 = vrot.lane.b32.xlu0 %v1129, 64
        %v1265 = vpop.permute.xlu0 %1264
        %v1267 = vsel %vm829, %v1220, 0
        %v1270 = vsel %vm971, %v1265, 0
        %1272 = vmatpush.bf16.msra.mxu0 0
        %1273 = vmatpush.bf16.msra.mxu0 0
        %1274 = vmatpush.bf16.msra.mxu0 0
        %1275 = vmatpush.bf16.msra.mxu0 0
        %1276 = vmatpush.bf16.msra.mxu0 0
        %1277 = vmatpush.bf16.msra.mxu0 0
        %1278 = vmatpush.bf16.msra.mxu0 0
        %1279 = vmatpush.bf16.msra.mxu0 %v1270
        %1280 = vmatmul.bf16.gmra.mxu0 %v1267
        %v1281 = vpop.f32.mrf.mxu0
        %v1282 = vadd.f32 0.0, %v1281
        %v1283 = vpop.f32.mrf.mxu0
        %1284 = vdwg.mxu0
        %1285 = vrot.lane.b32.xlu0 %v1152, 64
        %v1286 = vpop.permute.xlu0 %1285
        %v1288 = vsel %vm829, %v1221, 0
        %v1291 = vsel %vm971, %v1286, 0
        %1293 = vmatpush.bf16.msra.mxu0 0
        %1294 = vmatpush.bf16.msra.mxu0 0
        %1295 = vmatpush.bf16.msra.mxu0 0
        %1296 = vmatpush.bf16.msra.mxu0 0
        %1297 = vmatpush.bf16.msra.mxu0 0
        %1298 = vmatpush.bf16.msra.mxu0 0
        %1299 = vmatpush.bf16.msra.mxu0 0
        %1300 = vmatpush.bf16.msra.mxu0 %v1291
        %1301 = vmatmul.bf16.gmra.mxu0 %v1288
        %v1302 = vpop.f32.mrf.mxu0
        %v1303 = vadd.f32 0.0, %v1302
        %v1304 = vpop.f32.mrf.mxu0
        %1305 = vdwg.mxu0
        %1307 = vrot.lane.b32.xlu0 %v1261, 8
        %v1308 = vpop.permute.xlu0 %1307
        %1311 = vrot.lane.b32.xlu0 %v1282, 16
        %v1312 = vpop.permute.xlu0 %1311
        %1315 = vrot.lane.b32.xlu0 %v1303, 24
        %v1316 = vpop.permute.xlu0 %1315
        %v1318 = vsel %vm829, %v1240, %v1308
        %v1319 = vsel %vm1064, %v1318, %v1312
        %v1320 = vsel %vm1066, %v1319, %v1316
        %v1321 = vpack.c.bf16 %v1320, %v1067
        %v1322 = vld [vmem:[%s697] sm:$0xf]
        %v1323 = vld [vmem:[%s697 + $0x4] sm:$0xf]
        %v1324 = vld [vmem:[%s697 + $0x8] sm:$0xf]
        %v1325 = vld [vmem:[%s697 + $0xc] sm:$0xf]
        %v1326 = vld [vmem:[%s700] sm:$0x1]
        %v1328 = vperm.slane %v1326, 0
        %v1334 = vunpack.c.l.b16 %v1322
        %v1335 = vunpack.c.l.b16 %v1323
        %v1336 = vunpack.c.l.b16 %v1324
        %v1337 = vunpack.c.l.b16 %v1325
        %v1338 = vpack.c.b16 %v1335, %v1334
        %v1339 = vpack.c.b16 %v1337, %v1336
        %v1343 = vsel %vm787, %v1321, 0
        %1345 = vmatpush.bf16.msra.mxu0 0
        %1346 = vmatpush.bf16.msra.mxu0 0
        %1347 = vmatpush.bf16.msra.mxu0 0
        %1348 = vmatpush.bf16.msra.mxu0 0
        %1349 = vmatpush.bf16.msra.mxu0 0
        %1350 = vmatpush.bf16.msra.mxu0 0
        %1351 = vmatpush.bf16.msra.mxu0 %v1339
        %1352 = vmatpush.bf16.msra.mxu0 %v1338
        %1353 = vmatmul.bf16.gmra.mxu0 %v1343
        %v1354 = vpop.f32.mrf.mxu0
        %v1355 = vadd.f32 %v1328, %v1354
        %v1356 = vpop.f32.mrf.mxu0
        %v1357 = vadd.f32 %v1328, %v1356
        %1358 = vdwg.mxu0
        %v1359 = vadd.f32 %v764, %v1355
        %v1360 = vadd.f32 %v765, %v1357
        %v1361 = vld [vmem:[%s592] sm:$0x1]
        %v1362 = vld [vmem:[%s703] sm:$0x1]
        %v1363 = vsel %vm787, %v1359, 0.0
        %1364 = vadd.xlane.f32.xlu0 %v1363
        %v1365 = vpop.xlane.xlu0 %1364
        %v1366 = vsel %vm787, %v1360, 0.0
        %1367 = vadd.xlane.f32.xlu0 %v1366
        %v1368 = vpop.xlane.xlu0 %1367
        %v1369 = vrcp.pop 32.0
        %v1370 = vmul.f32 32.0, %v1369
        %v1371 = vsub.f32 1.0, %v1370
        %v1372 = vmul.f32 %v1369, %v1371
        %v1373 = vadd.f32 %v1369, %v1372
        %vm1374 = vweird.f32 %v1369
        %v1375 = vsel %vm1374, %v1369, %v1373
        %v1376 = vmul.f32 %v1365, %v1375
        %v1377 = vmul.f32 %v1368, %v1375
        %v1378 = vsub.f32 %v1359, %v1376
        %v1379 = vsub.f32 %v1360, %v1377
        %v1380 = vmul.f32 %v1378, %v1378
        %v1381 = vmul.f32 %v1379, %v1379
        %v1382 = vsel %vm787, %v1380, 0.0
        %1383 = vadd.xlane.f32.xlu0 %v1382
        %v1384 = vpop.xlane.xlu0 %1383
        %v1385 = vsel %vm787, %v1381, 0.0
        %1386 = vadd.xlane.f32.xlu0 %v1385
        %v1387 = vpop.xlane.xlu0 %1386
        %v1388 = vmul.f32 %v1384, 0.032258064
        %v1389 = vmul.f32 %v1387, 0.032258064
        %v1390 = vrsqrt.pop %v1388
        %v1391 = vmul.f32 %v1390, %v1388
        %v1392 = vmul.f32 %v1391, %v1390
        %v1393 = vmul.f32 0.5, %v1392
        %v1394 = vsub.f32 1.5, %v1393
        %v1395 = vmul.f32 %v1390, %v1394
        %v1396 = vmul.f32 %v1388, %v1395
        %vm1397 = vcmp.eq.f32.partialorder %v1388, inf
        %v1398 = vsel %vm1397, %v1388, %v1396
        %vm1399 = vcmp.eq.f32.partialorder %v1388, 0.0
        %v1400 = vand.u32 %v1388, 2147483648
        %v1401 = vsel %vm1399, %v1400, %v1398
        %v1402 = vrsqrt.pop %v1389
        %v1403 = vmul.f32 %v1402, %v1389
        %v1404 = vmul.f32 %v1403, %v1402
        %v1405 = vmul.f32 0.5, %v1404
        %v1406 = vsub.f32 1.5, %v1405
        %v1407 = vmul.f32 %v1402, %v1406
        %v1408 = vmul.f32 %v1389, %v1407
        %vm1409 = vcmp.eq.f32.partialorder %v1389, inf
        %v1410 = vsel %vm1409, %v1389, %v1408
        %vm1411 = vcmp.eq.f32.partialorder %v1389, 0.0
        %v1412 = vand.u32 %v1389, 2147483648
        %v1413 = vsel %vm1411, %v1412, %v1410
        %v1414 = vadd.f32 %v1401, 1e-12
        %v1415 = vadd.f32 %v1413, 1e-12
        %v1416 = vrcp.pop %v1414
        %v1417 = vmul.f32 %v1414, %v1416
        %v1418 = vsub.f32 1.0, %v1417
        %v1419 = vmul.f32 %v1416, %v1418
        %v1420 = vadd.f32 %v1416, %v1419
        %vm1421 = vweird.f32 %v1414
        %vm1422 = vweird.f32 %v1416
        %vm1423 = vmor %vm1421, %vm1422
        %v1424 = vsel %vm1423, %v1416, %v1420
        %v1425 = vand.u32 2147483647, %v1414
        %vm1426 = vcmp.eq.f32.partialorder %v1425, 8.507059e+37
        %v1427 = vand.u32 %v1414, 2147483648
        %v1428 = vor.u32 1.1754944e-38, %v1427
        %v1429 = vsel %vm1426, %v1428, %v1424
        %v1430 = vrcp.pop %v1415
        %v1431 = vmul.f32 %v1415, %v1430
        %v1432 = vsub.f32 1.0, %v1431
        %v1433 = vmul.f32 %v1430, %v1432
        %v1434 = vadd.f32 %v1430, %v1433
        %vm1435 = vweird.f32 %v1415
        %vm1436 = vweird.f32 %v1430
        %vm1437 = vmor %vm1435, %vm1436
        %v1438 = vsel %vm1437, %v1430, %v1434
        %v1439 = vand.u32 2147483647, %v1415
        %vm1440 = vcmp.eq.f32.partialorder %v1439, 8.507059e+37
        %v1441 = vand.u32 %v1415, 2147483648
        %v1442 = vor.u32 1.1754944e-38, %v1441
        %v1443 = vsel %vm1440, %v1442, %v1438
        %v1444 = vmul.f32 %v1378, %v1429
        %v1445 = vmul.f32 %v1379, %v1443
        %v1447 = vperm.slane %v1361, 0
        %v1449 = vmul.f32 %v1447, %v1444
        %v1450 = vmul.f32 %v1447, %v1445
        %v1452 = vperm.slane %v1362, 0
        %v1454 = vadd.f32 %v1449, %v1452
        %v1455 = vadd.f32 %v1450, %v1452
        %v1456 = vpack.c.bf16 %v1455, %v1454
        %v1457 = vld [vmem:[%s708] sm:$0xf]
        %v1458 = vld [vmem:[%s708 + $0x4] sm:$0xf]
        %v1459 = vld [vmem:[%s708 + $0x8] sm:$0xf]
        %v1460 = vld [vmem:[%s708 + $0xc] sm:$0xf]
        %v1461 = vld [vmem:[%s711] sm:$0x1]
        %v1463 = vperm.slane %v1461, 0
        %v1469 = vunpack.c.l.b16 %v1457
        %v1470 = vunpack.c.l.b16 %v1458
        %v1471 = vunpack.c.l.b16 %v1459
        %v1472 = vunpack.c.l.b16 %v1460
        %v1473 = vpack.c.b16 %v1470, %v1469
        %v1474 = vpack.c.b16 %v1472, %v1471
        %v1478 = vsel %vm787, %v1456, 0
        %1480 = vmatpush.bf16.msra.mxu0 0
        %1481 = vmatpush.bf16.msra.mxu0 0
        %1482 = vmatpush.bf16.msra.mxu0 0
        %1483 = vmatpush.bf16.msra.mxu0 0
        %1484 = vmatpush.bf16.msra.mxu0 0
        %1485 = vmatpush.bf16.msra.mxu0 0
        %1486 = vmatpush.bf16.msra.mxu0 %v1474
        %1487 = vmatpush.bf16.msra.mxu0 %v1473
        %1488 = vmatmul.bf16.gmra.mxu0 %v1478
        %v1489 = vpop.f32.mrf.mxu0
        %v1490 = vadd.f32 %v1463, %v1489
        %v1491 = vpop.f32.mrf.mxu0
        %v1492 = vadd.f32 %v1463, %v1491
        %1493 = vdwg.mxu0
        %v1494 = vmax.f32 %v1490, 0.0
        %v1495 = vmax.f32 %v1492, 0.0
        %v1496 = vpack.c.bf16 %v1495, %v1494
        %v1497 = vld [vmem:[%s716] sm:$0xf]
        %v1498 = vld [vmem:[%s716 + $0x4] sm:$0xf]
        %v1499 = vld [vmem:[%s716 + $0x8] sm:$0xf]
        %v1500 = vld [vmem:[%s716 + $0xc] sm:$0xf]
        %v1501 = vld [vmem:[%s716 + $0x10] sm:$0xf]
        %v1502 = vld [vmem:[%s716 + $0x14] sm:$0xf]
        %v1503 = vld [vmem:[%s716 + $0x18] sm:$0xf]
        %v1504 = vld [vmem:[%s716 + $0x1c] sm:$0xf]
        %v1505 = vld [vmem:[%s719] sm:$0x1]
        %v1507 = vperm.slane %v1505, 0
        %v1517 = vunpack.c.l.b16 %v1497
        %v1518 = vunpack.c.l.b16 %v1498
        %v1519 = vunpack.c.l.b16 %v1499
        %v1520 = vunpack.c.l.b16 %v1500
        %v1521 = vunpack.c.l.b16 %v1501
        %v1522 = vunpack.c.l.b16 %v1502
        %v1523 = vunpack.c.l.b16 %v1503
        %v1524 = vunpack.c.l.b16 %v1504
        %v1525 = vpack.c.b16 %v1518, %v1517
        %v1526 = vpack.c.b16 %v1520, %v1519
        %v1527 = vpack.c.b16 %v1522, %v1521
        %v1528 = vpack.c.b16 %v1524, %v1523
        %vm1533 = vcmask 523264
        %v1535 = vsel %vm1533, %v1496, 0
        %1537 = vmatpush.bf16.msra.mxu0 0
        %1538 = vmatpush.bf16.msra.mxu0 0
        %1539 = vmatpush.bf16.msra.mxu0 0
        %1540 = vmatpush.bf16.msra.mxu0 0
        %1541 = vmatpush.bf16.msra.mxu0 %v1528
        %1542 = vmatpush.bf16.msra.mxu0 %v1527
        %1543 = vmatpush.bf16.msra.mxu0 %v1526
        %1544 = vmatpush.bf16.msra.mxu0 %v1525
        %1545 = vmatmul.bf16.gmra.mxu0 %v1535
        %v1546 = vpop.f32.mrf.mxu0
        %v1547 = vadd.f32 %v1507, %v1546
        %v1548 = vpop.f32.mrf.mxu0
        %v1549 = vadd.f32 %v1507, %v1548
        %1550 = vdwg.mxu0
        %v1551 = vadd.f32 %v1454, %v1547
        %v1552 = vadd.f32 %v1455, %v1549
        %v1553 = vld [vmem:[%s601] sm:$0x1]
        %v1554 = vld [vmem:[%s722] sm:$0x1]
        %v1555 = vsel %vm787, %v1551, 0.0
        %1556 = vadd.xlane.f32.xlu0 %v1555
        %v1557 = vpop.xlane.xlu0 %1556
        %v1558 = vsel %vm787, %v1552, 0.0
        %1559 = vadd.xlane.f32.xlu0 %v1558
        %v1560 = vpop.xlane.xlu0 %1559
        %v1561 = vmul.f32 %v1557, %v1375
        %v1562 = vmul.f32 %v1560, %v1375
        %v1563 = vsub.f32 %v1551, %v1561
        %v1564 = vsub.f32 %v1552, %v1562
        %v1565 = vmul.f32 %v1563, %v1563
        %v1566 = vmul.f32 %v1564, %v1564
        %v1567 = vsel %vm787, %v1565, 0.0
        %1568 = vadd.xlane.f32.xlu0 %v1567
        %v1569 = vpop.xlane.xlu0 %1568
        %v1570 = vsel %vm787, %v1566, 0.0
        %1571 = vadd.xlane.f32.xlu0 %v1570
        %v1572 = vpop.xlane.xlu0 %1571
        %v1573 = vmul.f32 %v1569, 0.032258064
        %v1574 = vmul.f32 %v1572, 0.032258064
        %v1575 = vrsqrt.pop %v1573
        %v1576 = vmul.f32 %v1575, %v1573
        %v1577 = vmul.f32 %v1576, %v1575
        %v1578 = vmul.f32 0.5, %v1577
        %v1579 = vsub.f32 1.5, %v1578
        %v1580 = vmul.f32 %v1575, %v1579
        %v1581 = vmul.f32 %v1573, %v1580
        %vm1582 = vcmp.eq.f32.partialorder %v1573, inf
        %v1583 = vsel %vm1582, %v1573, %v1581
        %vm1584 = vcmp.eq.f32.partialorder %v1573, 0.0
        %v1585 = vand.u32 %v1573, 2147483648
        %v1586 = vsel %vm1584, %v1585, %v1583
        %v1587 = vrsqrt.pop %v1574
        %v1588 = vmul.f32 %v1587, %v1574
        %v1589 = vmul.f32 %v1588, %v1587
        %v1590 = vmul.f32 0.5, %v1589
        %v1591 = vsub.f32 1.5, %v1590
        %v1592 = vmul.f32 %v1587, %v1591
        %v1593 = vmul.f32 %v1574, %v1592
        %vm1594 = vcmp.eq.f32.partialorder %v1574, inf
        %v1595 = vsel %vm1594, %v1574, %v1593
        %vm1596 = vcmp.eq.f32.partialorder %v1574, 0.0
        %v1597 = vand.u32 %v1574, 2147483648
        %v1598 = vsel %vm1596, %v1597, %v1595
        %v1599 = vadd.f32 %v1586, 1e-12
        %v1600 = vadd.f32 %v1598, 1e-12
        %v1601 = vrcp.pop %v1599
        %v1602 = vmul.f32 %v1599, %v1601
        %v1603 = vsub.f32 1.0, %v1602
        %v1604 = vmul.f32 %v1601, %v1603
        %v1605 = vadd.f32 %v1601, %v1604
        %vm1606 = vweird.f32 %v1599
        %vm1607 = vweird.f32 %v1601
        %vm1608 = vmor %vm1606, %vm1607
        %v1609 = vsel %vm1608, %v1601, %v1605
        %v1610 = vand.u32 2147483647, %v1599
        %vm1611 = vcmp.eq.f32.partialorder %v1610, 8.507059e+37
        %v1612 = vand.u32 %v1599, 2147483648
        %v1613 = vor.u32 1.1754944e-38, %v1612
        %v1614 = vsel %vm1611, %v1613, %v1609
        %v1615 = vrcp.pop %v1600
        %v1616 = vmul.f32 %v1600, %v1615
        %v1617 = vsub.f32 1.0, %v1616
        %v1618 = vmul.f32 %v1615, %v1617
        %v1619 = vadd.f32 %v1615, %v1618
        %vm1620 = vweird.f32 %v1600
        %vm1621 = vweird.f32 %v1615
        %vm1622 = vmor %vm1620, %vm1621
        %v1623 = vsel %vm1622, %v1615, %v1619
        %v1624 = vand.u32 2147483647, %v1600
        %vm1625 = vcmp.eq.f32.partialorder %v1624, 8.507059e+37
        %v1626 = vand.u32 %v1600, 2147483648
        %v1627 = vor.u32 1.1754944e-38, %v1626
        %v1628 = vsel %vm1625, %v1627, %v1623
        %v1629 = vmul.f32 %v1563, %v1614
        %v1630 = vmul.f32 %v1564, %v1628
        %v1632 = vperm.slane %v1553, 0
        %v1634 = vmul.f32 %v1632, %v1629
        %v1635 = vmul.f32 %v1632, %v1630
        %v1637 = vperm.slane %v1554, 0
        %v1639 = vadd.f32 %v1634, %v1637
        %v1640 = vadd.f32 %v1635, %v1637
        %1641 = vst.msk [vmem:[#allocation2] sm:$0xff] %vm787, %v1639
        %1642 = vst.msk [vmem:[#allocation2 + $0x8] sm:$0xff] %vm787, %v1640
        %p1643 = scmp.eq.s32.totalorder %s29, 1
        // Predicated region
        $region101: #{tpu_custom_call.1} parent=79 // pred_check
          %p1644 = pneg %p1643
        $region102: #{tpu_custom_call.1} parent=79 // pred_check_branch
          %1646 = sbr.rel (%p1644) target = $region104
        $region103: #{tpu_custom_call.1} parent=79 // pred_region
          %1647 = vst.msk [vmem:[#allocation10] sm:$0xff] %vm787, %v1639
          %1648 = vst.msk [vmem:[#allocation10 + $0x8] sm:$0xff] %vm787, %v1640
        $region104: #{tpu_custom_call.1} parent=79 // pred_fallthru
          _
        // Predicated region
        $region105: #{tpu_custom_call.1} parent=79 // pred_check
          %p1649 = pneg %p417
        $region106: #{tpu_custom_call.1} parent=79 // pred_check_branch
          %1651 = sbr.rel (%p1649) target = $region108
        $region107: #{tpu_custom_call.1} parent=79 // pred_region
          %1653 = vsyncadd [#allocation5], 0
          %s1654 = sshll.u32 [#allocation10], 4
          %s1655 = int_to_ptr.vmem [resolvable:$true] %s1654
          %s1656 = sshll.u32 %s15, 4
          %s1657 = int_to_ptr.hbm [resolvable:$true] %s1656
          %1662 = dma.vmem_to_hbm [thread:$0]  %s1655, 256, %s1657, [#allocation5], 128, 128, 8
        $region108: #{tpu_custom_call.1} parent=79 // pred_fallthru
          _
        // Predicated region
        $region109: #{tpu_custom_call.1} parent=79 // pred_check
          %p1663 = pneg %p417
        $region110: #{tpu_custom_call.1} parent=79 // pred_check_branch
          %1665 = sbr.rel (%p1663) target = $region112
        $region111: #{tpu_custom_call.1} parent=79 // pred_region
          %1667 = dma.done [#allocation5], 256
        $region112: #{tpu_custom_call.1} parent=79 // pred_fallthru
          _
      $region80: #{tpu_custom_call.1} parent=5 // pred_fallthru
        _
      %p1668 = scmp.le.s32.totalorder 2, %s24
      // Predicated region
      $region113: #{tpu_custom_call.1} parent=5 // pred_check
        %p1669 = pneg %p1668
      $region114: #{tpu_custom_call.1} parent=5 // pred_check_branch
        %1671 = sbr.rel (%p1669) target = $region116
      $region115: #{tpu_custom_call.1} parent=5 // pred_region
        %s1672 = ssub.s32 %s24, 2
      $region116: #{tpu_custom_call.1} parent=5 // pred_fallthru
        _
    $region6: #{tpu_custom_call.1} parent=1 // loop_footer
      %s28 = sadd.s32 1, %s24
    $region7: #{tpu_custom_call.1} parent=1 // loop_footer_branch
      %23 = sbr.rel target = $region3
    $region8: #{tpu_custom_call.1} parent=1 // loop_exit
      _
    %1673 = vsyncpa [#allocation4], 1
    %s1674 = scalar_lea.sflag [#allocation4], 1
    %1675 = vsyncpa %s1674, 1
    %1676 = vsyncpa [#allocation7], 1
    %1677 = vsyncpa [#allocation5], 1
    %s1678 = scalar_lea.sflag [#allocation5], 1
    %1679 = vsyncpa %s1678, 1

</llo_original>
